<compile_context>
chip_gen: v5e
topology: v5e:2x2
jax: 0.10.0
libtpu: 0.0.40
codegen_flags: <defaults>
</compile_context>

<pallas_src>
import jax
import jax.numpy as jnp
from jax.experimental import pallas as pl
from jax.experimental.pallas import tpu as pltpu

HIDDEN_DIM = 768       # vit_b_16.hidden_dim
FC1 = 512
FC2 = 256
NUM_CLASSES = 1        # module default
BN_EPS = 1e-5


def _round_up(x, m):
    return ((x + m - 1) // m) * m


def _fc_head_kernel(x_ref, w1_ref, b1_ref, w2_ref, b2_ref, w3_ref, b3_ref, o_ref):
    # x: [TB, 768] bf16; w1: [768, 512] bf16 (BN folded); b1: [1, 512] f32
    x = x_ref[...]

    # Linear(768 -> 512) + folded BatchNorm1d(512), then Swish in f32.
    h = jnp.dot(x, w1_ref[...], preferred_element_type=jnp.float32) + b1_ref[...]
    h = h * jax.nn.sigmoid(h)                       # Swish: i * sigmoid(i)

    # Linear(512 -> 256) + folded BatchNorm1d(256), then Swish in f32.
    h = jnp.dot(h.astype(w2_ref.dtype), w2_ref[...],
                preferred_element_type=jnp.float32) + b2_ref[...]
    h = h * jax.nn.sigmoid(h)

    # Linear(256 -> 1): degenerate N=1 -> VPU multiply + lane reduction (no MXU).
    out = jnp.sum(h * w3_ref[...], axis=-1, keepdims=True) + b3_ref[...]

    # Dropout-averaged ensemble is a no-op in eval mode -> single pass.
    o_ref[...] = out.astype(o_ref.dtype)


def fc_head(x, params, *, block_b=256):
    """x: [B, HIDDEN_DIM] float32 features (post-ViT). Returns [B, NUM_CLASSES] f32."""
    B, D = x.shape
    assert D == HIDDEN_DIM
    (w1, b1, g1, be1, m1, v1,
     w2, b2, g2, be2, m2, v2,
     w3, b3) = params

    # Fold BatchNorm1d (eval mode) into the preceding Linear:
    #   y = (x @ w + b - m) / sqrt(v+eps) * g + be  =  x @ (w * s) + (b * s + t)
    s1 = g1 / jnp.sqrt(v1 + BN_EPS)
    t1 = be1 - m1 * s1
    s2 = g2 / jnp.sqrt(v2 + BN_EPS)
    t2 = be2 - m2 * s2

    w1f = (w1 * s1[None, :]).astype(jnp.bfloat16)          # [768, 512]
    b1f = (b1 * s1 + t1).astype(jnp.float32).reshape(1, FC1)
    w2f = (w2 * s2[None, :]).astype(jnp.bfloat16)           # [512, 256]
    b2f = (b2 * s2 + t2).astype(jnp.float32).reshape(1, FC2)
    w3r = w3.astype(jnp.float32).reshape(1, FC2)             # row for VPU reduction
    b3r = b3.astype(jnp.float32).reshape(1, 1)

    xb = x.astype(jnp.bfloat16)

    # Tile the batch dimension; pad B up so the block divides evenly and
    # satisfies the (8, 128) sublane constraint.
    tb = min(block_b, _round_up(B, 8))
    Bp = _round_up(B, tb)
    if Bp != B:
        xb = jnp.pad(xb, ((0, Bp - B), (0, 0)))
    grid = (Bp // tb,)

    const = lambda shape: pl.BlockSpec(shape, lambda i: (0,) * len(shape))

    out = pl.pallas_call(
        _fc_head_kernel,
        out_shape=jax.ShapeDtypeStruct((Bp, NUM_CLASSES), jnp.float32),
        grid=grid,
        in_specs=[
            pl.BlockSpec((tb, D), lambda i: (i, 0)),   # activations: tiled over batch
            const((D, FC1)), const((1, FC1)),          # weights: VMEM-resident
            const((FC1, FC2)), const((1, FC2)),
            const((1, FC2)), const((1, 1)),
        ],
        out_specs=pl.BlockSpec((tb, NUM_CLASSES), lambda i: (i, 0)),
        compiler_params=pltpu.CompilerParams(
            dimension_semantics=("parallel",)),        # shard batch tiles on v7x
    )(xb, w1f, b1f, w2f, b2f, w3r, b3r)

    return out[:B]


def init_params(key):
    ks = jax.random.split(key, 8)
    w1 = jax.random.normal(ks[0], (HIDDEN_DIM, FC1), jnp.float32) * 0.02
    b1 = jax.random.normal(ks[1], (FC1,), jnp.float32) * 0.01
    g1 = 1.0 + 0.05 * jax.random.normal(ks[2], (FC1,), jnp.float32)
    be1 = 0.05 * jax.random.normal(ks[3], (FC1,), jnp.float32)
    m1 = 0.1 * jax.random.normal(ks[4], (FC1,), jnp.float32)
    v1 = 1.0 + 0.1 * jax.random.uniform(ks[5], (FC1,), jnp.float32)

    ks2 = jax.random.split(ks[6], 8)
    w2 = jax.random.normal(ks2[0], (FC1, FC2), jnp.float32) * 0.02
    b2 = jax.random.normal(ks2[1], (FC2,), jnp.float32) * 0.01
    g2 = 1.0 + 0.05 * jax.random.normal(ks2[2], (FC2,), jnp.float32)
    be2 = 0.05 * jax.random.normal(ks2[3], (FC2,), jnp.float32)
    m2 = 0.1 * jax.random.normal(ks2[4], (FC2,), jnp.float32)
    v2 = 1.0 + 0.1 * jax.random.uniform(ks2[5], (FC2,), jnp.float32)

    w3 = jax.random.normal(ks2[6], (FC2, NUM_CLASSES), jnp.float32) * 0.02
    b3 = jax.random.normal(ks2[7], (NUM_CLASSES,), jnp.float32) * 0.01

    return (w1, b1, g1, be1, m1, v1,
            w2, b2, g2, be2, m2, v2,
            w3, b3)


def fc_head_ref(x, params):
    """Pure-JAX reference of the same eval-mode forward, with matching bf16 casts."""
    (w1, b1, g1, be1, m1, v1,
     w2, b2, g2, be2, m2, v2,
     w3, b3) = params
    s1 = g1 / jnp.sqrt(v1 + BN_EPS)
    t1 = be1 - m1 * s1
    s2 = g2 / jnp.sqrt(v2 + BN_EPS)
    t2 = be2 - m2 * s2
    w1f = (w1 * s1[None, :]).astype(jnp.bfloat16)
    b1f = b1 * s1 + t1
    w2f = (w2 * s2[None, :]).astype(jnp.bfloat16)
    b2f = b2 * s2 + t2

    h = jnp.dot(x.astype(jnp.bfloat16), w1f, preferred_element_type=jnp.float32) + b1f
    h = h * jax.nn.sigmoid(h)
    h = jnp.dot(h.astype(jnp.bfloat16), w2f, preferred_element_type=jnp.float32) + b2f
    h = h * jax.nn.sigmoid(h)
    out = jnp.sum(h * w3.reshape(1, FC2), axis=-1, keepdims=True) + b3.reshape(1, 1)
    # Eval-mode droupouts-pass average == single pass.
    return out


if __name__ == "__main__":
    key = jax.random.PRNGKey(0)
    k_feat, k_param = jax.random.split(key)

    B = 8
    # Post-backbone ViT features (stand-in for self.extract(image).squeeze()).
    x_feat = jax.random.normal(k_feat, (B, HIDDEN_DIM), jnp.float32)
    params = init_params(k_param)

    out = fc_head(x_feat, params)
    out = jax.block_until_ready(out)

    ref = fc_head_ref(x_feat, params)
    assert out.shape == (B, NUM_CLASSES), out.shape
    assert jnp.allclose(out, ref, atol=2e-3, rtol=2e-3), \
        float(jnp.max(jnp.abs(out - ref)))

    print("KERNEL_OK")
</pallas_src>

<mosaic_0001>
module attributes {stable_mosaic.version = 11 : i64} {
  func.func @_fc_head_kernel(%arg0: i32, %arg1: memref<8x768xbf16, #tpu.memory_space<vmem>>, %arg2: memref<768x512xbf16, #tpu.memory_space<vmem>>, %arg3: memref<1x512xf32, #tpu.memory_space<vmem>>, %arg4: memref<512x256xbf16, #tpu.memory_space<vmem>>, %arg5: memref<1x256xf32, #tpu.memory_space<vmem>>, %arg6: memref<1x256xf32, #tpu.memory_space<vmem>>, %arg7: memref<1x1xf32, #tpu.memory_space<vmem>>, %arg8: memref<8x1xf32, #tpu.memory_space<vmem>>) attributes {dimension_semantics = [#tpu.dimension_semantics<parallel>], iteration_bounds = array<i64: 1>, scalar_prefetch = 0 : i64, scratch_operands = 0 : i64, tpu.core_type = #tpu.core_type<tc>, window_params = [{transform_indices = @transform_0, window_bounds = array<i64: 8, 768>}, {pipeline_mode = #tpu.pipeline_mode<synchronous>, transform_indices = @transform_1, window_bounds = array<i64: 768, 512>}, {pipeline_mode = #tpu.pipeline_mode<synchronous>, transform_indices = @transform_2, window_bounds = array<i64: 1, 512>}, {pipeline_mode = #tpu.pipeline_mode<synchronous>, transform_indices = @transform_3, window_bounds = array<i64: 512, 256>}, {pipeline_mode = #tpu.pipeline_mode<synchronous>, transform_indices = @transform_4, window_bounds = array<i64: 1, 256>}, {pipeline_mode = #tpu.pipeline_mode<synchronous>, transform_indices = @transform_5, window_bounds = array<i64: 1, 256>}, {pipeline_mode = #tpu.pipeline_mode<synchronous>, transform_indices = @transform_6, window_bounds = array<i64: 1, 1>}, {transform_indices = @transform_7, window_bounds = array<i64: 8, 1>}]} {
    %c0 = arith.constant 0 : index
    %c0_0 = arith.constant 0 : index
    %0 = vector.load %arg1[%c0, %c0_0] : memref<8x768xbf16, #tpu.memory_space<vmem>>, vector<8x768xbf16>
    %c0_1 = arith.constant 0 : index
    %c0_2 = arith.constant 0 : index
    %1 = vector.load %arg2[%c0_1, %c0_2] : memref<768x512xbf16, #tpu.memory_space<vmem>>, vector<768x512xbf16>
    %cst = arith.constant dense<0.000000e+00> : vector<8x512xf32>
    %2 = tpu.matmul %0, %1, %cst {dimension_numbers = #tpu.dot_dimension_numbers<[1], [0], [0], [1], [0, 0, 1, 1], [], []>} : vector<8x768xbf16>, vector<768x512xbf16>, vector<8x512xf32> -> vector<8x512xf32>
    %c0_3 = arith.constant 0 : index
    %c0_4 = arith.constant 0 : index
    %3 = vector.load %arg3[%c0_3, %c0_4] : memref<1x512xf32, #tpu.memory_space<vmem>>, vector<1x512xf32>
    %4 = vector.broadcast %3 : vector<1x512xf32> to vector<8x512xf32>
    %5 = arith.addf %2, %4 : vector<8x512xf32>
    %6 = arith.negf %5 : vector<8x512xf32>
    %7 = math.exp %6 : vector<8x512xf32>
    %cst_5 = arith.constant 1.000000e+00 : f32
    %8 = vector.broadcast %cst_5 : f32 to vector<8x512xf32>
    %9 = arith.addf %8, %7 : vector<8x512xf32>
    %10 = arith.divf %8, %9 : vector<8x512xf32>
    %11 = arith.mulf %5, %10 : vector<8x512xf32>
    %12 = arith.truncf %11 : vector<8x512xf32> to vector<8x512xbf16>
    %c0_6 = arith.constant 0 : index
    %c0_7 = arith.constant 0 : index
    %13 = vector.load %arg4[%c0_6, %c0_7] : memref<512x256xbf16, #tpu.memory_space<vmem>>, vector<512x256xbf16>
    %cst_8 = arith.constant dense<0.000000e+00> : vector<8x256xf32>
    %14 = tpu.matmul %12, %13, %cst_8 {dimension_numbers = #tpu.dot_dimension_numbers<[1], [0], [0], [1], [0, 0, 1, 1], [], []>} : vector<8x512xbf16>, vector<512x256xbf16>, vector<8x256xf32> -> vector<8x256xf32>
    %c0_9 = arith.constant 0 : index
    %c0_10 = arith.constant 0 : index
    %15 = vector.load %arg5[%c0_9, %c0_10] : memref<1x256xf32, #tpu.memory_space<vmem>>, vector<1x256xf32>
    %16 = vector.broadcast %15 : vector<1x256xf32> to vector<8x256xf32>
    %17 = arith.addf %14, %16 : vector<8x256xf32>
    %18 = arith.negf %17 : vector<8x256xf32>
    %19 = math.exp %18 : vector<8x256xf32>
    %cst_11 = arith.constant 1.000000e+00 : f32
    %20 = vector.broadcast %cst_11 : f32 to vector<8x256xf32>
    %21 = arith.addf %20, %19 : vector<8x256xf32>
    %22 = arith.divf %20, %21 : vector<8x256xf32>
    %23 = arith.mulf %17, %22 : vector<8x256xf32>
    %c0_12 = arith.constant 0 : index
    %c0_13 = arith.constant 0 : index
    %24 = vector.load %arg6[%c0_12, %c0_13] : memref<1x256xf32, #tpu.memory_space<vmem>>, vector<1x256xf32>
    %25 = vector.broadcast %24 : vector<1x256xf32> to vector<8x256xf32>
    %26 = arith.mulf %23, %25 : vector<8x256xf32>
    %cst_14 = arith.constant dense<0.000000e+00> : vector<8xf32>
    %27 = vector.multi_reduction <add>, %26, %cst_14 [1] : vector<8x256xf32> to vector<8xf32>
    %28 = vector.shape_cast %27 : vector<8xf32> to vector<8x1xf32>
    %c0_15 = arith.constant 0 : index
    %c0_16 = arith.constant 0 : index
    %29 = vector.load %arg7[%c0_15, %c0_16] : memref<1x1xf32, #tpu.memory_space<vmem>>, vector<1x1xf32>
    %30 = vector.broadcast %29 : vector<1x1xf32> to vector<8x1xf32>
    %31 = arith.addf %28, %30 : vector<8x1xf32>
    %c0_17 = arith.constant 0 : index
    %c0_18 = arith.constant 0 : index
    %32 = vector.load %arg8[%c0_17, %c0_18] : memref<8x1xf32, #tpu.memory_space<vmem>>, vector<8x1xf32>
    tpu.vector_store %arg8[%c0_17, %c0_18], %31 {strides = array<i32>} : memref<8x1xf32, #tpu.memory_space<vmem>>, vector<8x1xf32>,
    return
  }
  func.func @transform_0(%arg0: i32) -> (i32, i32) {
    %c0_i32 = arith.constant 0 : i32
    %c0_i32_0 = arith.constant 0 : i32
    return %arg0, %c0_i32 : i32, i32
  }
  func.func @transform_1(%arg0: i32) -> (i32, i32) {
    %c0_i32 = arith.constant 0 : i32
    %c0_i32_0 = arith.constant 0 : i32
    %c0_i32_1 = arith.constant 0 : i32
    return %c0_i32, %c0_i32_0 : i32, i32
  }
  func.func @transform_2(%arg0: i32) -> (i32, i32) {
    %c0_i32 = arith.constant 0 : i32
    %c0_i32_0 = arith.constant 0 : i32
    %c0_i32_1 = arith.constant 0 : i32
    return %c0_i32, %c0_i32_0 : i32, i32
  }
  func.func @transform_3(%arg0: i32) -> (i32, i32) {
    %c0_i32 = arith.constant 0 : i32
    %c0_i32_0 = arith.constant 0 : i32
    %c0_i32_1 = arith.constant 0 : i32
    return %c0_i32, %c0_i32_0 : i32, i32
  }
  func.func @transform_4(%arg0: i32) -> (i32, i32) {
    %c0_i32 = arith.constant 0 : i32
    %c0_i32_0 = arith.constant 0 : i32
    %c0_i32_1 = arith.constant 0 : i32
    return %c0_i32, %c0_i32_0 : i32, i32
  }
  func.func @transform_5(%arg0: i32) -> (i32, i32) {
    %c0_i32 = arith.constant 0 : i32
    %c0_i32_0 = arith.constant 0 : i32
    %c0_i32_1 = arith.constant 0 : i32
    return %c0_i32, %c0_i32_0 : i32, i32
  }
  func.func @transform_6(%arg0: i32) -> (i32, i32) {
    %c0_i32 = arith.constant 0 : i32
    %c0_i32_0 = arith.constant 0 : i32
    %c0_i32_1 = arith.constant 0 : i32
    return %c0_i32, %c0_i32_0 : i32, i32
  }
  func.func @transform_7(%arg0: i32) -> (i32, i32) {
    %c0_i32 = arith.constant 0 : i32
    %c0_i32_0 = arith.constant 0 : i32
    return %arg0, %c0_i32 : i32, i32
  }
}

</mosaic_0001>

<llo_original>
// kernel: tpu_custom_call.1
$region0: #{tpu_custom_call.1}
  #allocation0 [shape = 'u32[]', space=smem, size = 0x4, offset = 0x4, fixed_abs, tag = 'smem constant byte address 0x4 - core index']
  #allocation1 [shape = 'u32[72,128]{1,0:T(1,128)}', space=vmem, size = 0x9000, scoped, tag = 'internal scratch']
  #allocation2 [shape = 'f32[1,1]{1,0:T(1,128)S(1)}', space=vmem, size = 0x200, scoped, tag = 'scoped memory for tpu_custom_call.1']
  %s0 = inlined_call_operand.hbm [shape: bf16[8,768], index: 0, kind: input, shape index: {}]
  %s1 = inlined_call_operand.hbm [shape: bf16[768,512], index: 1, kind: input, shape index: {}]
  %s2 = inlined_call_operand.hbm [shape: f32[1,512], index: 2, kind: input, shape index: {}]
  %s3 = inlined_call_operand.hbm [shape: bf16[512,256], index: 3, kind: input, shape index: {}]
  %s4 = inlined_call_operand.vmem [shape: f32[1,256], index: 4, kind: input, shape index: {}]
  %s5 = inlined_call_operand.vmem [shape: f32[1,256], index: 5, kind: input, shape index: {}]
  %s6 = inlined_call_operand.<no memory space> [shape: f32[1,1], index: 6, kind: input, shape index: {}]
  %s7 = inlined_call_operand.vmem [shape: f32[8,1], index: 7, kind: output, shape index: {}]
  %s8 = sld [smem:[#allocation0]]
  $region54: #{tpu_custom_call.1} parent=0
    _
  %s10 = ssub.s32 1, %s8
  %s11 = scalar_select 0, %s10, %s8
  %v12 = vstv %s6
  %13 = vst [vmem:[#allocation2] sm:$0x1] %v12
  $region1: #{tpu_custom_call.1} parent=0
    #allocation3 [shape = 'u8[12288]{0}', space=vmem, size = 0x3000, scoped, tag = 'input window, operand 0, single buffered']
    #allocation4 [shape = 's32[1]{0}', space=sflag, size = 0x4, scoped, tag = 'scoped memory for tpu_custom_call.1']
    #allocation5 [shape = 'u8[786432]{0}', space=vmem, size = 0xc0000, scoped, tag = 'input window, operand 1, single buffered']
    #allocation6 [shape = 's32[1]{0}', space=sflag, size = 0x4, scoped, tag = 'scoped memory for tpu_custom_call.1']
    #allocation7 [shape = 'u8[2048]{0}', space=vmem, size = 0x800, scoped, tag = 'input window, operand 2, single buffered']
    #allocation8 [shape = 'u8[262144]{0}', space=vmem, size = 0x40000, scoped, tag = 'input window, operand 3, single buffered']
    #allocation9 [shape = 's32[1]{0}', space=sflag, size = 0x4, scoped, tag = 'scoped memory for tpu_custom_call.1']
    %14 = vsyncpa [#allocation4], 0
    %15 = vsyncpa [#allocation6], 0
    %16 = vsyncpa [#allocation9], 0
    // Predicated region
    $region2: #{tpu_custom_call.1} parent=1 // pred_check
      _
    $region3: #{tpu_custom_call.1} parent=1 // pred_check_branch
      %18 = sbr.rel (0) target = $region5
    $region4: #{tpu_custom_call.1} parent=1 // pred_region
      %20 = vsyncadd [#allocation4], 0
      %s22 = sshll.u32 %s0, 4
      %s23 = int_to_ptr.hbm [resolvable:$true] %s22
      %s24 = sshll.u32 [#allocation3], 4
      %s25 = int_to_ptr.vmem [resolvable:$true] %s24
      %27 = dma.hbm_to_vmem [thread:$0]  %s23, 384, %s25, [#allocation4]
    $region5: #{tpu_custom_call.1} parent=1 // pred_fallthru
      _
    // Predicated region
    $region6: #{tpu_custom_call.1} parent=1 // pred_check
      _
    $region7: #{tpu_custom_call.1} parent=1 // pred_check_branch
      %29 = sbr.rel (0) target = $region9
    $region8: #{tpu_custom_call.1} parent=1 // pred_region
      %31 = vsyncadd [#allocation6], 0
      %s32 = sshll.u32 %s1, 4
      %s33 = int_to_ptr.hbm [resolvable:$true] %s32
      %s34 = sshll.u32 [#allocation5], 4
      %s35 = int_to_ptr.vmem [resolvable:$true] %s34
      %40 = dma.hbm_to_vmem [thread:$0]  %s33, 24576, %s35, [#allocation6], 256, 256, 16
    $region9: #{tpu_custom_call.1} parent=1 // pred_fallthru
      _
    // Predicated region
    $region10: #{tpu_custom_call.1} parent=1 // pred_check
      _
    $region11: #{tpu_custom_call.1} parent=1 // pred_check_branch
      %42 = sbr.rel (0) target = $region13
    $region12: #{tpu_custom_call.1} parent=1 // pred_region
      %44 = vsyncadd [#allocation6], 0
      %s46 = sshll.u32 %s2, 4
      %s47 = int_to_ptr.hbm [resolvable:$true] %s46
      %s48 = sshll.u32 [#allocation7], 4
      %s49 = int_to_ptr.vmem [resolvable:$true] %s48
      %51 = dma.hbm_to_vmem [thread:$0]  %s47, 64, %s49, [#allocation6]
    $region13: #{tpu_custom_call.1} parent=1 // pred_fallthru
      _
    // Predicated region
    $region14: #{tpu_custom_call.1} parent=1 // pred_check
      _
    $region15: #{tpu_custom_call.1} parent=1 // pred_check_branch
      %53 = sbr.rel (0) target = $region17
    $region16: #{tpu_custom_call.1} parent=1 // pred_region
      %55 = vsyncadd [#allocation9], 0
      %s56 = sshll.u32 %s3, 4
      %s57 = int_to_ptr.hbm [resolvable:$true] %s56
      %s58 = sshll.u32 [#allocation8], 4
      %s59 = int_to_ptr.vmem [resolvable:$true] %s58
      %64 = dma.hbm_to_vmem [thread:$0]  %s57, 8192, %s59, [#allocation9], 128, 128, 8
    $region17: #{tpu_custom_call.1} parent=1 // pred_fallthru
      _
    // Predicated region
    $region18: #{tpu_custom_call.1} parent=1 // pred_check
      _
    $region19: #{tpu_custom_call.1} parent=1 // pred_check_branch
      %66 = sbr.rel (0) target = $region21
    $region20: #{tpu_custom_call.1} parent=1 // pred_region
      _
    $region21: #{tpu_custom_call.1} parent=1 // pred_fallthru
      _
    // Predicated region
    $region22: #{tpu_custom_call.1} parent=1 // pred_check
      _
    $region23: #{tpu_custom_call.1} parent=1 // pred_check_branch
      %68 = sbr.rel (0) target = $region25
    $region24: #{tpu_custom_call.1} parent=1 // pred_region
      _
    $region25: #{tpu_custom_call.1} parent=1 // pred_fallthru
      _
    // Predicated region
    $region26: #{tpu_custom_call.1} parent=1 // pred_check
      _
    $region27: #{tpu_custom_call.1} parent=1 // pred_check_branch
      %70 = sbr.rel (0) target = $region29
    $region28: #{tpu_custom_call.1} parent=1 // pred_region
      _
    $region29: #{tpu_custom_call.1} parent=1 // pred_fallthru
      _
    // Predicated region
    $region30: #{tpu_custom_call.1} parent=1 // pred_check
      _
    $region31: #{tpu_custom_call.1} parent=1 // pred_check_branch
      %72 = sbr.rel (0) target = $region33
    $region32: #{tpu_custom_call.1} parent=1 // pred_region
      %74 = dma.done [#allocation4], 384
    $region33: #{tpu_custom_call.1} parent=1 // pred_fallthru
      _
    // Predicated region
    $region34: #{tpu_custom_call.1} parent=1 // pred_check
      _
    $region35: #{tpu_custom_call.1} parent=1 // pred_check_branch
      %76 = sbr.rel (0) target = $region37
    $region36: #{tpu_custom_call.1} parent=1 // pred_region
      %78 = dma.done [#allocation6], 24576
    $region37: #{tpu_custom_call.1} parent=1 // pred_fallthru
      _
    // Predicated region
    $region38: #{tpu_custom_call.1} parent=1 // pred_check
      _
    $region39: #{tpu_custom_call.1} parent=1 // pred_check_branch
      %80 = sbr.rel (0) target = $region41
    $region40: #{tpu_custom_call.1} parent=1 // pred_region
      %82 = dma.done [#allocation6], 64
    $region41: #{tpu_custom_call.1} parent=1 // pred_fallthru
      _
    // Predicated region
    $region42: #{tpu_custom_call.1} parent=1 // pred_check
      _
    $region43: #{tpu_custom_call.1} parent=1 // pred_check_branch
      %84 = sbr.rel (0) target = $region45
    $region44: #{tpu_custom_call.1} parent=1 // pred_region
      %86 = dma.done [#allocation9], 8192
    $region45: #{tpu_custom_call.1} parent=1 // pred_fallthru
      _
    %v87 = vld [vmem:[#allocation3] sm:$0xff]
    %v88 = vld [vmem:[#allocation3 + $0x8] sm:$0xff]
    %v89 = vld [vmem:[#allocation3 + $0x10] sm:$0xff]
    %v90 = vld [vmem:[#allocation5] sm:$0xff]
    %v91 = vld [vmem:[#allocation5 + $0x8] sm:$0xff]
    %v92 = vld [vmem:[#allocation5 + $0x10] sm:$0xff]
    %v93 = vld [vmem:[#allocation5 + $0x18] sm:$0xff]
    %v94 = vld [vmem:[#allocation5 + $0x20] sm:$0xff]
    %v95 = vld [vmem:[#allocation5 + $0x28] sm:$0xff]
    %v96 = vld [vmem:[#allocation5 + $0x30] sm:$0xff]
    %v97 = vld [vmem:[#allocation5 + $0x38] sm:$0xff]
    %v98 = vld [vmem:[#allocation5 + $0x40] sm:$0xff]
    %v99 = vld [vmem:[#allocation5 + $0x48] sm:$0xff]
    %v100 = vld [vmem:[#allocation5 + $0x50] sm:$0xff]
    %v101 = vld [vmem:[#allocation5 + $0x58] sm:$0xff]
    %v102 = vld [vmem:[#allocation5 + $0x60] sm:$0xff]
    %v103 = vld [vmem:[#allocation5 + $0x68] sm:$0xff]
    %v104 = vld [vmem:[#allocation5 + $0x70] sm:$0xff]
    %v105 = vld [vmem:[#allocation5 + $0x78] sm:$0xff]
    %v106 = vld [vmem:[#allocation5 + $0x80] sm:$0xff]
    %v107 = vld [vmem:[#allocation5 + $0x88] sm:$0xff]
    %v108 = vld [vmem:[#allocation5 + $0x90] sm:$0xff]
    %v109 = vld [vmem:[#allocation5 + $0x98] sm:$0xff]
    %v110 = vld [vmem:[#allocation5 + $0xa0] sm:$0xff]
    %v111 = vld [vmem:[#allocation5 + $0xa8] sm:$0xff]
    %v112 = vld [vmem:[#allocation5 + $0xb0] sm:$0xff]
    %v113 = vld [vmem:[#allocation5 + $0xb8] sm:$0xff]
    %v114 = vld [vmem:[#allocation5 + $0xc0] sm:$0xff]
    %v115 = vld [vmem:[#allocation5 + $0xc8] sm:$0xff]
    %v116 = vld [vmem:[#allocation5 + $0xd0] sm:$0xff]
    %v117 = vld [vmem:[#allocation5 + $0xd8] sm:$0xff]
    %v118 = vld [vmem:[#allocation5 + $0xe0] sm:$0xff]
    %v119 = vld [vmem:[#allocation5 + $0xe8] sm:$0xff]
    %v120 = vld [vmem:[#allocation5 + $0xf0] sm:$0xff]
    %v121 = vld [vmem:[#allocation5 + $0xf8] sm:$0xff]
    %v122 = vld [vmem:[#allocation5 + $0x100] sm:$0xff]
    %v123 = vld [vmem:[#allocation5 + $0x108] sm:$0xff]
    %v124 = vld [vmem:[#allocation5 + $0x110] sm:$0xff]
    %v125 = vld [vmem:[#allocation5 + $0x118] sm:$0xff]
    %v126 = vld [vmem:[#allocation5 + $0x120] sm:$0xff]
    %v127 = vld [vmem:[#allocation5 + $0x128] sm:$0xff]
    %v128 = vld [vmem:[#allocation5 + $0x130] sm:$0xff]
    %v129 = vld [vmem:[#allocation5 + $0x138] sm:$0xff]
    %v130 = vld [vmem:[#allocation5 + $0x140] sm:$0xff]
    %v131 = vld [vmem:[#allocation5 + $0x148] sm:$0xff]
    %v132 = vld [vmem:[#allocation5 + $0x150] sm:$0xff]
    %v133 = vld [vmem:[#allocation5 + $0x158] sm:$0xff]
    %v134 = vld [vmem:[#allocation5 + $0x160] sm:$0xff]
    %v135 = vld [vmem:[#allocation5 + $0x168] sm:$0xff]
    %v136 = vld [vmem:[#allocation5 + $0x170] sm:$0xff]
    %v137 = vld [vmem:[#allocation5 + $0x178] sm:$0xff]
    %v138 = vld [vmem:[#allocation5 + $0x180] sm:$0xff]
    %v139 = vld [vmem:[#allocation5 + $0x188] sm:$0xff]
    %v140 = vld [vmem:[#allocation5 + $0x190] sm:$0xff]
    %v141 = vld [vmem:[#allocation5 + $0x198] sm:$0xff]
    %v142 = vld [vmem:[#allocation5 + $0x1a0] sm:$0xff]
    %v143 = vld [vmem:[#allocation5 + $0x1a8] sm:$0xff]
    %v144 = vld [vmem:[#allocation5 + $0x1b0] sm:$0xff]
    %v145 = vld [vmem:[#allocation5 + $0x1b8] sm:$0xff]
    %v146 = vld [vmem:[#allocation5 + $0x1c0] sm:$0xff]
    %v147 = vld [vmem:[#allocation5 + $0x1c8] sm:$0xff]
    %v148 = vld [vmem:[#allocation5 + $0x1d0] sm:$0xff]
    %v149 = vld [vmem:[#allocation5 + $0x1d8] sm:$0xff]
    %v150 = vld [vmem:[#allocation5 + $0x1e0] sm:$0xff]
    %v151 = vld [vmem:[#allocation5 + $0x1e8] sm:$0xff]
    %v152 = vld [vmem:[#allocation5 + $0x1f0] sm:$0xff]
    %v153 = vld [vmem:[#allocation5 + $0x1f8] sm:$0xff]
    %v154 = vld [vmem:[#allocation5 + $0x200] sm:$0xff]
    %v155 = vld [vmem:[#allocation5 + $0x208] sm:$0xff]
    %v156 = vld [vmem:[#allocation5 + $0x210] sm:$0xff]
    %v157 = vld [vmem:[#allocation5 + $0x218] sm:$0xff]
    %v158 = vld [vmem:[#allocation5 + $0x220] sm:$0xff]
    %v159 = vld [vmem:[#allocation5 + $0x228] sm:$0xff]
    %v160 = vld [vmem:[#allocation5 + $0x230] sm:$0xff]
    %v161 = vld [vmem:[#allocation5 + $0x238] sm:$0xff]
    %v162 = vld [vmem:[#allocation5 + $0x240] sm:$0xff]
    %v163 = vld [vmem:[#allocation5 + $0x248] sm:$0xff]
    %v164 = vld [vmem:[#allocation5 + $0x250] sm:$0xff]
    %v165 = vld [vmem:[#allocation5 + $0x258] sm:$0xff]
    %v166 = vld [vmem:[#allocation5 + $0x260] sm:$0xff]
    %v167 = vld [vmem:[#allocation5 + $0x268] sm:$0xff]
    %v168 = vld [vmem:[#allocation5 + $0x270] sm:$0xff]
    %v169 = vld [vmem:[#allocation5 + $0x278] sm:$0xff]
    %v170 = vld [vmem:[#allocation5 + $0x280] sm:$0xff]
    %v171 = vld [vmem:[#allocation5 + $0x288] sm:$0xff]
    %v172 = vld [vmem:[#allocation5 + $0x290] sm:$0xff]
    %v173 = vld [vmem:[#allocation5 + $0x298] sm:$0xff]
    %v174 = vld [vmem:[#allocation5 + $0x2a0] sm:$0xff]
    %v175 = vld [vmem:[#allocation5 + $0x2a8] sm:$0xff]
    %v176 = vld [vmem:[#allocation5 + $0x2b0] sm:$0xff]
    %v177 = vld [vmem:[#allocation5 + $0x2b8] sm:$0xff]
    %v178 = vld [vmem:[#allocation5 + $0x2c0] sm:$0xff]
    %v179 = vld [vmem:[#allocation5 + $0x2c8] sm:$0xff]
    %v180 = vld [vmem:[#allocation5 + $0x2d0] sm:$0xff]
    %v181 = vld [vmem:[#allocation5 + $0x2d8] sm:$0xff]
    %v182 = vld [vmem:[#allocation5 + $0x2e0] sm:$0xff]
    %v183 = vld [vmem:[#allocation5 + $0x2e8] sm:$0xff]
    %v184 = vld [vmem:[#allocation5 + $0x2f0] sm:$0xff]
    %v185 = vld [vmem:[#allocation5 + $0x2f8] sm:$0xff]
    %v186 = vld [vmem:[#allocation5 + $0x300] sm:$0xff]
    %v187 = vld [vmem:[#allocation5 + $0x308] sm:$0xff]
    %v188 = vld [vmem:[#allocation5 + $0x310] sm:$0xff]
    %v189 = vld [vmem:[#allocation5 + $0x318] sm:$0xff]
    %v190 = vld [vmem:[#allocation5 + $0x320] sm:$0xff]
    %v191 = vld [vmem:[#allocation5 + $0x328] sm:$0xff]
    %v192 = vld [vmem:[#allocation5 + $0x330] sm:$0xff]
    %v193 = vld [vmem:[#allocation5 + $0x338] sm:$0xff]
    %v194 = vld [vmem:[#allocation5 + $0x340] sm:$0xff]
    %v195 = vld [vmem:[#allocation5 + $0x348] sm:$0xff]
    %v196 = vld [vmem:[#allocation5 + $0x350] sm:$0xff]
    %v197 = vld [vmem:[#allocation5 + $0x358] sm:$0xff]
    %v198 = vld [vmem:[#allocation5 + $0x360] sm:$0xff]
    %v199 = vld [vmem:[#allocation5 + $0x368] sm:$0xff]
    %v200 = vld [vmem:[#allocation5 + $0x370] sm:$0xff]
    %v201 = vld [vmem:[#allocation5 + $0x378] sm:$0xff]
    %v202 = vld [vmem:[#allocation5 + $0x380] sm:$0xff]
    %v203 = vld [vmem:[#allocation5 + $0x388] sm:$0xff]
    %v204 = vld [vmem:[#allocation5 + $0x390] sm:$0xff]
    %v205 = vld [vmem:[#allocation5 + $0x398] sm:$0xff]
    %v206 = vld [vmem:[#allocation5 + $0x3a0] sm:$0xff]
    %v207 = vld [vmem:[#allocation5 + $0x3a8] sm:$0xff]
    %v208 = vld [vmem:[#allocation5 + $0x3b0] sm:$0xff]
    %v209 = vld [vmem:[#allocation5 + $0x3b8] sm:$0xff]
    %v210 = vld [vmem:[#allocation5 + $0x3c0] sm:$0xff]
    %v211 = vld [vmem:[#allocation5 + $0x3c8] sm:$0xff]
    %v212 = vld [vmem:[#allocation5 + $0x3d0] sm:$0xff]
    %v213 = vld [vmem:[#allocation5 + $0x3d8] sm:$0xff]
    %v214 = vld [vmem:[#allocation5 + $0x3e0] sm:$0xff]
    %v215 = vld [vmem:[#allocation5 + $0x3e8] sm:$0xff]
    %v216 = vld [vmem:[#allocation5 + $0x3f0] sm:$0xff]
    %v217 = vld [vmem:[#allocation5 + $0x3f8] sm:$0xff]
    %v218 = vld [vmem:[#allocation5 + $0x400] sm:$0xff]
    %v219 = vld [vmem:[#allocation5 + $0x408] sm:$0xff]
    %v220 = vld [vmem:[#allocation5 + $0x410] sm:$0xff]
    %v221 = vld [vmem:[#allocation5 + $0x418] sm:$0xff]
    %v222 = vld [vmem:[#allocation5 + $0x420] sm:$0xff]
    %v223 = vld [vmem:[#allocation5 + $0x428] sm:$0xff]
    %v224 = vld [vmem:[#allocation5 + $0x430] sm:$0xff]
    %v225 = vld [vmem:[#allocation5 + $0x438] sm:$0xff]
    %v226 = vld [vmem:[#allocation5 + $0x440] sm:$0xff]
    %v227 = vld [vmem:[#allocation5 + $0x448] sm:$0xff]
    %v228 = vld [vmem:[#allocation5 + $0x450] sm:$0xff]
    %v229 = vld [vmem:[#allocation5 + $0x458] sm:$0xff]
    %v230 = vld [vmem:[#allocation5 + $0x460] sm:$0xff]
    %v231 = vld [vmem:[#allocation5 + $0x468] sm:$0xff]
    %v232 = vld [vmem:[#allocation5 + $0x470] sm:$0xff]
    %v233 = vld [vmem:[#allocation5 + $0x478] sm:$0xff]
    %v234 = vld [vmem:[#allocation5 + $0x480] sm:$0xff]
    %v235 = vld [vmem:[#allocation5 + $0x488] sm:$0xff]
    %v236 = vld [vmem:[#allocation5 + $0x490] sm:$0xff]
    %v237 = vld [vmem:[#allocation5 + $0x498] sm:$0xff]
    %v238 = vld [vmem:[#allocation5 + $0x4a0] sm:$0xff]
    %v239 = vld [vmem:[#allocation5 + $0x4a8] sm:$0xff]
    %v240 = vld [vmem:[#allocation5 + $0x4b0] sm:$0xff]
    %v241 = vld [vmem:[#allocation5 + $0x4b8] sm:$0xff]
    %v242 = vld [vmem:[#allocation5 + $0x4c0] sm:$0xff]
    %v243 = vld [vmem:[#allocation5 + $0x4c8] sm:$0xff]
    %v244 = vld [vmem:[#allocation5 + $0x4d0] sm:$0xff]
    %v245 = vld [vmem:[#allocation5 + $0x4d8] sm:$0xff]
    %v246 = vld [vmem:[#allocation5 + $0x4e0] sm:$0xff]
    %v247 = vld [vmem:[#allocation5 + $0x4e8] sm:$0xff]
    %v248 = vld [vmem:[#allocation5 + $0x4f0] sm:$0xff]
    %v249 = vld [vmem:[#allocation5 + $0x4f8] sm:$0xff]
    %v250 = vld [vmem:[#allocation5 + $0x500] sm:$0xff]
    %v251 = vld [vmem:[#allocation5 + $0x508] sm:$0xff]
    %v252 = vld [vmem:[#allocation5 + $0x510] sm:$0xff]
    %v253 = vld [vmem:[#allocation5 + $0x518] sm:$0xff]
    %v254 = vld [vmem:[#allocation5 + $0x520] sm:$0xff]
    %v255 = vld [vmem:[#allocation5 + $0x528] sm:$0xff]
    %v256 = vld [vmem:[#allocation5 + $0x530] sm:$0xff]
    %v257 = vld [vmem:[#allocation5 + $0x538] sm:$0xff]
    %v258 = vld [vmem:[#allocation5 + $0x540] sm:$0xff]
    %v259 = vld [vmem:[#allocation5 + $0x548] sm:$0xff]
    %v260 = vld [vmem:[#allocation5 + $0x550] sm:$0xff]
    %v261 = vld [vmem:[#allocation5 + $0x558] sm:$0xff]
    %v262 = vld [vmem:[#allocation5 + $0x560] sm:$0xff]
    %v263 = vld [vmem:[#allocation5 + $0x568] sm:$0xff]
    %v264 = vld [vmem:[#allocation5 + $0x570] sm:$0xff]
    %v265 = vld [vmem:[#allocation5 + $0x578] sm:$0xff]
    %v266 = vld [vmem:[#allocation5 + $0x580] sm:$0xff]
    %v267 = vld [vmem:[#allocation5 + $0x588] sm:$0xff]
    %v268 = vld [vmem:[#allocation5 + $0x590] sm:$0xff]
    %v269 = vld [vmem:[#allocation5 + $0x598] sm:$0xff]
    %v270 = vld [vmem:[#allocation5 + $0x5a0] sm:$0xff]
    %v271 = vld [vmem:[#allocation5 + $0x5a8] sm:$0xff]
    %v272 = vld [vmem:[#allocation5 + $0x5b0] sm:$0xff]
    %v273 = vld [vmem:[#allocation5 + $0x5b8] sm:$0xff]
    %v274 = vld [vmem:[#allocation5 + $0x5c0] sm:$0xff]
    %v275 = vld [vmem:[#allocation5 + $0x5c8] sm:$0xff]
    %v276 = vld [vmem:[#allocation5 + $0x5d0] sm:$0xff]
    %v277 = vld [vmem:[#allocation5 + $0x5d8] sm:$0xff]
    %v278 = vld [vmem:[#allocation5 + $0x5e0] sm:$0xff]
    %v279 = vld [vmem:[#allocation5 + $0x5e8] sm:$0xff]
    %v280 = vld [vmem:[#allocation5 + $0x5f0] sm:$0xff]
    %v281 = vld [vmem:[#allocation5 + $0x5f8] sm:$0xff]
    %v282 = vld [vmem:[#allocation7] sm:$0xf]
    %v284 = vperm.slane %v282, 0
    %v285 = vperm.slane %v282, 1
    %v286 = vperm.slane %v282, 2
    %v287 = vperm.slane %v282, 3
    %v295 = vunpack.c.l.b16 %v87
    %v296 = vunpack.c.h.b16 %v87
    %v297 = vunpack.c.l.b16 %v88
    %v298 = vunpack.c.h.b16 %v88
    %v299 = vunpack.c.l.b16 %v89
    %v300 = vunpack.c.h.b16 %v89
    %v301 = vpack.c.b16 %v295, %v295
    %v302 = vpack.c.b16 %v296, %v296
    %v303 = vpack.c.b16 %v297, %v297
    %v304 = vpack.c.b16 %v298, %v298
    %v305 = vpack.c.b16 %v299, %v299
    %v306 = vpack.c.b16 %v300, %v300
    %v505 = vunpack.c.l.b16 %v90
    %v506 = vunpack.c.h.b16 %v90
    %v507 = vunpack.c.l.b16 %v91
    %v508 = vunpack.c.h.b16 %v91
    %v509 = vunpack.c.l.b16 %v92
    %v510 = vunpack.c.h.b16 %v92
    %v511 = vunpack.c.l.b16 %v93
    %v512 = vunpack.c.h.b16 %v93
    %v513 = vunpack.c.l.b16 %v94
    %v514 = vunpack.c.h.b16 %v94
    %v515 = vunpack.c.l.b16 %v95
    %v516 = vunpack.c.h.b16 %v95
    %v517 = vunpack.c.l.b16 %v96
    %v518 = vunpack.c.h.b16 %v96
    %v519 = vunpack.c.l.b16 %v97
    %v520 = vunpack.c.h.b16 %v97
    %v521 = vunpack.c.l.b16 %v98
    %v522 = vunpack.c.h.b16 %v98
    %v523 = vunpack.c.l.b16 %v99
    %v524 = vunpack.c.h.b16 %v99
    %v525 = vunpack.c.l.b16 %v100
    %v526 = vunpack.c.h.b16 %v100
    %v527 = vunpack.c.l.b16 %v101
    %v528 = vunpack.c.h.b16 %v101
    %v529 = vunpack.c.l.b16 %v102
    %v530 = vunpack.c.h.b16 %v102
    %v531 = vunpack.c.l.b16 %v103
    %v532 = vunpack.c.h.b16 %v103
    %v533 = vunpack.c.l.b16 %v104
    %v534 = vunpack.c.h.b16 %v104
    %v535 = vunpack.c.l.b16 %v105
    %v536 = vunpack.c.h.b16 %v105
    %v537 = vunpack.c.l.b16 %v106
    %v538 = vunpack.c.h.b16 %v106
    %v539 = vunpack.c.l.b16 %v107
    %v540 = vunpack.c.h.b16 %v107
    %v541 = vunpack.c.l.b16 %v108
    %v542 = vunpack.c.h.b16 %v108
    %v543 = vunpack.c.l.b16 %v109
    %v544 = vunpack.c.h.b16 %v109
    %v545 = vunpack.c.l.b16 %v110
    %v546 = vunpack.c.h.b16 %v110
    %v547 = vunpack.c.l.b16 %v111
    %v548 = vunpack.c.h.b16 %v111
    %v549 = vunpack.c.l.b16 %v112
    %v550 = vunpack.c.h.b16 %v112
    %v551 = vunpack.c.l.b16 %v113
    %v552 = vunpack.c.h.b16 %v113
    %v553 = vunpack.c.l.b16 %v114
    %v554 = vunpack.c.h.b16 %v114
    %v555 = vunpack.c.l.b16 %v115
    %v556 = vunpack.c.h.b16 %v115
    %v557 = vunpack.c.l.b16 %v116
    %v558 = vunpack.c.h.b16 %v116
    %v559 = vunpack.c.l.b16 %v117
    %v560 = vunpack.c.h.b16 %v117
    %v561 = vunpack.c.l.b16 %v118
    %v562 = vunpack.c.h.b16 %v118
    %v563 = vunpack.c.l.b16 %v119
    %v564 = vunpack.c.h.b16 %v119
    %v565 = vunpack.c.l.b16 %v120
    %v566 = vunpack.c.h.b16 %v120
    %v567 = vunpack.c.l.b16 %v121
    %v568 = vunpack.c.h.b16 %v121
    %v569 = vunpack.c.l.b16 %v122
    %v570 = vunpack.c.h.b16 %v122
    %v571 = vunpack.c.l.b16 %v123
    %v572 = vunpack.c.h.b16 %v123
    %v573 = vunpack.c.l.b16 %v124
    %v574 = vunpack.c.h.b16 %v124
    %v575 = vunpack.c.l.b16 %v125
    %v576 = vunpack.c.h.b16 %v125
    %v577 = vunpack.c.l.b16 %v126
    %v578 = vunpack.c.h.b16 %v126
    %v579 = vunpack.c.l.b16 %v127
    %v580 = vunpack.c.h.b16 %v127
    %v581 = vunpack.c.l.b16 %v128
    %v582 = vunpack.c.h.b16 %v128
    %v583 = vunpack.c.l.b16 %v129
    %v584 = vunpack.c.h.b16 %v129
    %v585 = vunpack.c.l.b16 %v130
    %v586 = vunpack.c.h.b16 %v130
    %v587 = vunpack.c.l.b16 %v131
    %v588 = vunpack.c.h.b16 %v131
    %v589 = vunpack.c.l.b16 %v132
    %v590 = vunpack.c.h.b16 %v132
    %v591 = vunpack.c.l.b16 %v133
    %v592 = vunpack.c.h.b16 %v133
    %v593 = vunpack.c.l.b16 %v134
    %v594 = vunpack.c.h.b16 %v134
    %v595 = vunpack.c.l.b16 %v135
    %v596 = vunpack.c.h.b16 %v135
    %v597 = vunpack.c.l.b16 %v136
    %v598 = vunpack.c.h.b16 %v136
    %v599 = vunpack.c.l.b16 %v137
    %v600 = vunpack.c.h.b16 %v137
    %v601 = vunpack.c.l.b16 %v138
    %v602 = vunpack.c.h.b16 %v138
    %v603 = vunpack.c.l.b16 %v139
    %v604 = vunpack.c.h.b16 %v139
    %v605 = vunpack.c.l.b16 %v140
    %v606 = vunpack.c.h.b16 %v140
    %v607 = vunpack.c.l.b16 %v141
    %v608 = vunpack.c.h.b16 %v141
    %v609 = vunpack.c.l.b16 %v142
    %v610 = vunpack.c.h.b16 %v142
    %v611 = vunpack.c.l.b16 %v143
    %v612 = vunpack.c.h.b16 %v143
    %v613 = vunpack.c.l.b16 %v144
    %v614 = vunpack.c.h.b16 %v144
    %v615 = vunpack.c.l.b16 %v145
    %v616 = vunpack.c.h.b16 %v145
    %v617 = vunpack.c.l.b16 %v146
    %v618 = vunpack.c.h.b16 %v146
    %v619 = vunpack.c.l.b16 %v147
    %v620 = vunpack.c.h.b16 %v147
    %v621 = vunpack.c.l.b16 %v148
    %v622 = vunpack.c.h.b16 %v148
    %v623 = vunpack.c.l.b16 %v149
    %v624 = vunpack.c.h.b16 %v149
    %v625 = vunpack.c.l.b16 %v150
    %v626 = vunpack.c.h.b16 %v150
    %v627 = vunpack.c.l.b16 %v151
    %v628 = vunpack.c.h.b16 %v151
    %v629 = vunpack.c.l.b16 %v152
    %v630 = vunpack.c.h.b16 %v152
    %v631 = vunpack.c.l.b16 %v153
    %v632 = vunpack.c.h.b16 %v153
    %v633 = vunpack.c.l.b16 %v154
    %v634 = vunpack.c.h.b16 %v154
    %v635 = vunpack.c.l.b16 %v155
    %v636 = vunpack.c.h.b16 %v155
    %v637 = vunpack.c.l.b16 %v156
    %v638 = vunpack.c.h.b16 %v156
    %v639 = vunpack.c.l.b16 %v157
    %v640 = vunpack.c.h.b16 %v157
    %v641 = vunpack.c.l.b16 %v158
    %v642 = vunpack.c.h.b16 %v158
    %v643 = vunpack.c.l.b16 %v159
    %v644 = vunpack.c.h.b16 %v159
    %v645 = vunpack.c.l.b16 %v160
    %v646 = vunpack.c.h.b16 %v160
    %v647 = vunpack.c.l.b16 %v161
    %v648 = vunpack.c.h.b16 %v161
    %v649 = vunpack.c.l.b16 %v162
    %v650 = vunpack.c.h.b16 %v162
    %v651 = vunpack.c.l.b16 %v163
    %v652 = vunpack.c.h.b16 %v163
    %v653 = vunpack.c.l.b16 %v164
    %v654 = vunpack.c.h.b16 %v164
    %v655 = vunpack.c.l.b16 %v165
    %v656 = vunpack.c.h.b16 %v165
    %v657 = vunpack.c.l.b16 %v166
    %v658 = vunpack.c.h.b16 %v166
    %v659 = vunpack.c.l.b16 %v167
    %v660 = vunpack.c.h.b16 %v167
    %v661 = vunpack.c.l.b16 %v168
    %v662 = vunpack.c.h.b16 %v168
    %v663 = vunpack.c.l.b16 %v169
    %v664 = vunpack.c.h.b16 %v169
    %v665 = vunpack.c.l.b16 %v170
    %v666 = vunpack.c.h.b16 %v170
    %v667 = vunpack.c.l.b16 %v171
    %v668 = vunpack.c.h.b16 %v171
    %v669 = vunpack.c.l.b16 %v172
    %v670 = vunpack.c.h.b16 %v172
    %v671 = vunpack.c.l.b16 %v173
    %v672 = vunpack.c.h.b16 %v173
    %v673 = vunpack.c.l.b16 %v174
    %v674 = vunpack.c.h.b16 %v174
    %v675 = vunpack.c.l.b16 %v175
    %v676 = vunpack.c.h.b16 %v175
    %v677 = vunpack.c.l.b16 %v176
    %v678 = vunpack.c.h.b16 %v176
    %v679 = vunpack.c.l.b16 %v177
    %v680 = vunpack.c.h.b16 %v177
    %v681 = vunpack.c.l.b16 %v178
    %v682 = vunpack.c.h.b16 %v178
    %v683 = vunpack.c.l.b16 %v179
    %v684 = vunpack.c.h.b16 %v179
    %v685 = vunpack.c.l.b16 %v180
    %v686 = vunpack.c.h.b16 %v180
    %v687 = vunpack.c.l.b16 %v181
    %v688 = vunpack.c.h.b16 %v181
    %v689 = vunpack.c.l.b16 %v182
    %v690 = vunpack.c.h.b16 %v182
    %v691 = vunpack.c.l.b16 %v183
    %v692 = vunpack.c.h.b16 %v183
    %v693 = vunpack.c.l.b16 %v184
    %v694 = vunpack.c.h.b16 %v184
    %v695 = vunpack.c.l.b16 %v185
    %v696 = vunpack.c.h.b16 %v185
    %v697 = vunpack.c.l.b16 %v186
    %v698 = vunpack.c.h.b16 %v186
    %v699 = vunpack.c.l.b16 %v187
    %v700 = vunpack.c.h.b16 %v187
    %v701 = vunpack.c.l.b16 %v188
    %v702 = vunpack.c.h.b16 %v188
    %v703 = vunpack.c.l.b16 %v189
    %v704 = vunpack.c.h.b16 %v189
    %v705 = vunpack.c.l.b16 %v190
    %v706 = vunpack.c.h.b16 %v190
    %v707 = vunpack.c.l.b16 %v191
    %v708 = vunpack.c.h.b16 %v191
    %v709 = vunpack.c.l.b16 %v192
    %v710 = vunpack.c.h.b16 %v192
    %v711 = vunpack.c.l.b16 %v193
    %v712 = vunpack.c.h.b16 %v193
    %v713 = vunpack.c.l.b16 %v194
    %v714 = vunpack.c.h.b16 %v194
    %v715 = vunpack.c.l.b16 %v195
    %v716 = vunpack.c.h.b16 %v195
    %v717 = vunpack.c.l.b16 %v196
    %v718 = vunpack.c.h.b16 %v196
    %v719 = vunpack.c.l.b16 %v197
    %v720 = vunpack.c.h.b16 %v197
    %v721 = vunpack.c.l.b16 %v198
    %v722 = vunpack.c.h.b16 %v198
    %v723 = vunpack.c.l.b16 %v199
    %v724 = vunpack.c.h.b16 %v199
    %v725 = vunpack.c.l.b16 %v200
    %v726 = vunpack.c.h.b16 %v200
    %v727 = vunpack.c.l.b16 %v201
    %v728 = vunpack.c.h.b16 %v201
    %v729 = vunpack.c.l.b16 %v202
    %v730 = vunpack.c.h.b16 %v202
    %v731 = vunpack.c.l.b16 %v203
    %v732 = vunpack.c.h.b16 %v203
    %v733 = vunpack.c.l.b16 %v204
    %v734 = vunpack.c.h.b16 %v204
    %v735 = vunpack.c.l.b16 %v205
    %v736 = vunpack.c.h.b16 %v205
    %v737 = vunpack.c.l.b16 %v206
    %v738 = vunpack.c.h.b16 %v206
    %v739 = vunpack.c.l.b16 %v207
    %v740 = vunpack.c.h.b16 %v207
    %v741 = vunpack.c.l.b16 %v208
    %v742 = vunpack.c.h.b16 %v208
    %v743 = vunpack.c.l.b16 %v209
    %v744 = vunpack.c.h.b16 %v209
    %v745 = vunpack.c.l.b16 %v210
    %v746 = vunpack.c.h.b16 %v210
    %v747 = vunpack.c.l.b16 %v211
    %v748 = vunpack.c.h.b16 %v211
    %v749 = vunpack.c.l.b16 %v212
    %v750 = vunpack.c.h.b16 %v212
    %v751 = vunpack.c.l.b16 %v213
    %v752 = vunpack.c.h.b16 %v213
    %v753 = vunpack.c.l.b16 %v214
    %v754 = vunpack.c.h.b16 %v214
    %v755 = vunpack.c.l.b16 %v215
    %v756 = vunpack.c.h.b16 %v215
    %v757 = vunpack.c.l.b16 %v216
    %v758 = vunpack.c.h.b16 %v216
    %v759 = vunpack.c.l.b16 %v217
    %v760 = vunpack.c.h.b16 %v217
    %v761 = vunpack.c.l.b16 %v218
    %v762 = vunpack.c.h.b16 %v218
    %v763 = vunpack.c.l.b16 %v219
    %v764 = vunpack.c.h.b16 %v219
    %v765 = vunpack.c.l.b16 %v220
    %v766 = vunpack.c.h.b16 %v220
    %v767 = vunpack.c.l.b16 %v221
    %v768 = vunpack.c.h.b16 %v221
    %v769 = vunpack.c.l.b16 %v222
    %v770 = vunpack.c.h.b16 %v222
    %v771 = vunpack.c.l.b16 %v223
    %v772 = vunpack.c.h.b16 %v223
    %v773 = vunpack.c.l.b16 %v224
    %v774 = vunpack.c.h.b16 %v224
    %v775 = vunpack.c.l.b16 %v225
    %v776 = vunpack.c.h.b16 %v225
    %v777 = vunpack.c.l.b16 %v226
    %v778 = vunpack.c.h.b16 %v226
    %v779 = vunpack.c.l.b16 %v227
    %v780 = vunpack.c.h.b16 %v227
    %v781 = vunpack.c.l.b16 %v228
    %v782 = vunpack.c.h.b16 %v228
    %v783 = vunpack.c.l.b16 %v229
    %v784 = vunpack.c.h.b16 %v229
    %v785 = vunpack.c.l.b16 %v230
    %v786 = vunpack.c.h.b16 %v230
    %v787 = vunpack.c.l.b16 %v231
    %v788 = vunpack.c.h.b16 %v231
    %v789 = vunpack.c.l.b16 %v232
    %v790 = vunpack.c.h.b16 %v232
    %v791 = vunpack.c.l.b16 %v233
    %v792 = vunpack.c.h.b16 %v233
    %v793 = vunpack.c.l.b16 %v234
    %v794 = vunpack.c.h.b16 %v234
    %v795 = vunpack.c.l.b16 %v235
    %v796 = vunpack.c.h.b16 %v235
    %v797 = vunpack.c.l.b16 %v236
    %v798 = vunpack.c.h.b16 %v236
    %v799 = vunpack.c.l.b16 %v237
    %v800 = vunpack.c.h.b16 %v237
    %v801 = vunpack.c.l.b16 %v238
    %v802 = vunpack.c.h.b16 %v238
    %v803 = vunpack.c.l.b16 %v239
    %v804 = vunpack.c.h.b16 %v239
    %v805 = vunpack.c.l.b16 %v240
    %v806 = vunpack.c.h.b16 %v240
    %v807 = vunpack.c.l.b16 %v241
    %v808 = vunpack.c.h.b16 %v241
    %v809 = vunpack.c.l.b16 %v242
    %v810 = vunpack.c.h.b16 %v242
    %v811 = vunpack.c.l.b16 %v243
    %v812 = vunpack.c.h.b16 %v243
    %v813 = vunpack.c.l.b16 %v244
    %v814 = vunpack.c.h.b16 %v244
    %v815 = vunpack.c.l.b16 %v245
    %v816 = vunpack.c.h.b16 %v245
    %v817 = vunpack.c.l.b16 %v246
    %v818 = vunpack.c.h.b16 %v246
    %v819 = vunpack.c.l.b16 %v247
    %v820 = vunpack.c.h.b16 %v247
    %v821 = vunpack.c.l.b16 %v248
    %v822 = vunpack.c.h.b16 %v248
    %v823 = vunpack.c.l.b16 %v249
    %v824 = vunpack.c.h.b16 %v249
    %v825 = vunpack.c.l.b16 %v250
    %v826 = vunpack.c.h.b16 %v250
    %v827 = vunpack.c.l.b16 %v251
    %v828 = vunpack.c.h.b16 %v251
    %v829 = vunpack.c.l.b16 %v252
    %v830 = vunpack.c.h.b16 %v252
    %v831 = vunpack.c.l.b16 %v253
    %v832 = vunpack.c.h.b16 %v253
    %v833 = vunpack.c.l.b16 %v254
    %v834 = vunpack.c.h.b16 %v254
    %v835 = vunpack.c.l.b16 %v255
    %v836 = vunpack.c.h.b16 %v255
    %v837 = vunpack.c.l.b16 %v256
    %v838 = vunpack.c.h.b16 %v256
    %v839 = vunpack.c.l.b16 %v257
    %v840 = vunpack.c.h.b16 %v257
    %v841 = vunpack.c.l.b16 %v258
    %v842 = vunpack.c.h.b16 %v258
    %v843 = vunpack.c.l.b16 %v259
    %v844 = vunpack.c.h.b16 %v259
    %v845 = vunpack.c.l.b16 %v260
    %v846 = vunpack.c.h.b16 %v260
    %v847 = vunpack.c.l.b16 %v261
    %v848 = vunpack.c.h.b16 %v261
    %v849 = vunpack.c.l.b16 %v262
    %v850 = vunpack.c.h.b16 %v262
    %v851 = vunpack.c.l.b16 %v263
    %v852 = vunpack.c.h.b16 %v263
    %v853 = vunpack.c.l.b16 %v264
    %v854 = vunpack.c.h.b16 %v264
    %v855 = vunpack.c.l.b16 %v265
    %v856 = vunpack.c.h.b16 %v265
    %v857 = vunpack.c.l.b16 %v266
    %v858 = vunpack.c.h.b16 %v266
    %v859 = vunpack.c.l.b16 %v267
    %v860 = vunpack.c.h.b16 %v267
    %v861 = vunpack.c.l.b16 %v268
    %v862 = vunpack.c.h.b16 %v268
    %v863 = vunpack.c.l.b16 %v269
    %v864 = vunpack.c.h.b16 %v269
    %v865 = vunpack.c.l.b16 %v270
    %v866 = vunpack.c.h.b16 %v270
    %v867 = vunpack.c.l.b16 %v271
    %v868 = vunpack.c.h.b16 %v271
    %v869 = vunpack.c.l.b16 %v272
    %v870 = vunpack.c.h.b16 %v272
    %v871 = vunpack.c.l.b16 %v273
    %v872 = vunpack.c.h.b16 %v273
    %v873 = vunpack.c.l.b16 %v274
    %v874 = vunpack.c.h.b16 %v274
    %v875 = vunpack.c.l.b16 %v275
    %v876 = vunpack.c.h.b16 %v275
    %v877 = vunpack.c.l.b16 %v276
    %v878 = vunpack.c.h.b16 %v276
    %v879 = vunpack.c.l.b16 %v277
    %v880 = vunpack.c.h.b16 %v277
    %v881 = vunpack.c.l.b16 %v278
    %v882 = vunpack.c.h.b16 %v278
    %v883 = vunpack.c.l.b16 %v279
    %v884 = vunpack.c.h.b16 %v279
    %v885 = vunpack.c.l.b16 %v280
    %v886 = vunpack.c.h.b16 %v280
    %v887 = vunpack.c.l.b16 %v281
    %v888 = vunpack.c.h.b16 %v281
    %v889 = vpack.c.b16 %v509, %v505
    %v890 = vpack.c.b16 %v510, %v506
    %v891 = vpack.c.b16 %v511, %v507
    %v892 = vpack.c.b16 %v512, %v508
    %v893 = vpack.c.b16 %v517, %v513
    %v894 = vpack.c.b16 %v518, %v514
    %v895 = vpack.c.b16 %v519, %v515
    %v896 = vpack.c.b16 %v520, %v516
    %v897 = vpack.c.b16 %v525, %v521
    %v898 = vpack.c.b16 %v526, %v522
    %v899 = vpack.c.b16 %v527, %v523
    %v900 = vpack.c.b16 %v528, %v524
    %v901 = vpack.c.b16 %v533, %v529
    %v902 = vpack.c.b16 %v534, %v530
    %v903 = vpack.c.b16 %v535, %v531
    %v904 = vpack.c.b16 %v536, %v532
    %v905 = vpack.c.b16 %v541, %v537
    %v906 = vpack.c.b16 %v542, %v538
    %v907 = vpack.c.b16 %v543, %v539
    %v908 = vpack.c.b16 %v544, %v540
    %v909 = vpack.c.b16 %v549, %v545
    %v910 = vpack.c.b16 %v550, %v546
    %v911 = vpack.c.b16 %v551, %v547
    %v912 = vpack.c.b16 %v552, %v548
    %v913 = vpack.c.b16 %v557, %v553
    %v914 = vpack.c.b16 %v558, %v554
    %v915 = vpack.c.b16 %v559, %v555
    %v916 = vpack.c.b16 %v560, %v556
    %v917 = vpack.c.b16 %v565, %v561
    %v918 = vpack.c.b16 %v566, %v562
    %v919 = vpack.c.b16 %v567, %v563
    %v920 = vpack.c.b16 %v568, %v564
    %v921 = vpack.c.b16 %v573, %v569
    %v922 = vpack.c.b16 %v574, %v570
    %v923 = vpack.c.b16 %v575, %v571
    %v924 = vpack.c.b16 %v576, %v572
    %v925 = vpack.c.b16 %v581, %v577
    %v926 = vpack.c.b16 %v582, %v578
    %v927 = vpack.c.b16 %v583, %v579
    %v928 = vpack.c.b16 %v584, %v580
    %v929 = vpack.c.b16 %v589, %v585
    %v930 = vpack.c.b16 %v590, %v586
    %v931 = vpack.c.b16 %v591, %v587
    %v932 = vpack.c.b16 %v592, %v588
    %v933 = vpack.c.b16 %v597, %v593
    %v934 = vpack.c.b16 %v598, %v594
    %v935 = vpack.c.b16 %v599, %v595
    %v936 = vpack.c.b16 %v600, %v596
    %v937 = vpack.c.b16 %v605, %v601
    %v938 = vpack.c.b16 %v606, %v602
    %v939 = vpack.c.b16 %v607, %v603
    %v940 = vpack.c.b16 %v608, %v604
    %v941 = vpack.c.b16 %v613, %v609
    %v942 = vpack.c.b16 %v614, %v610
    %v943 = vpack.c.b16 %v615, %v611
    %v944 = vpack.c.b16 %v616, %v612
    %v945 = vpack.c.b16 %v621, %v617
    %v946 = vpack.c.b16 %v622, %v618
    %v947 = vpack.c.b16 %v623, %v619
    %v948 = vpack.c.b16 %v624, %v620
    %v949 = vpack.c.b16 %v629, %v625
    %v950 = vpack.c.b16 %v630, %v626
    %v951 = vpack.c.b16 %v631, %v627
    %v952 = vpack.c.b16 %v632, %v628
    %v953 = vpack.c.b16 %v637, %v633
    %v954 = vpack.c.b16 %v638, %v634
    %v955 = vpack.c.b16 %v639, %v635
    %v956 = vpack.c.b16 %v640, %v636
    %v957 = vpack.c.b16 %v645, %v641
    %v958 = vpack.c.b16 %v646, %v642
    %v959 = vpack.c.b16 %v647, %v643
    %v960 = vpack.c.b16 %v648, %v644
    %v961 = vpack.c.b16 %v653, %v649
    %v962 = vpack.c.b16 %v654, %v650
    %v963 = vpack.c.b16 %v655, %v651
    %v964 = vpack.c.b16 %v656, %v652
    %v965 = vpack.c.b16 %v661, %v657
    %v966 = vpack.c.b16 %v662, %v658
    %v967 = vpack.c.b16 %v663, %v659
    %v968 = vpack.c.b16 %v664, %v660
    %v969 = vpack.c.b16 %v669, %v665
    %v970 = vpack.c.b16 %v670, %v666
    %v971 = vpack.c.b16 %v671, %v667
    %v972 = vpack.c.b16 %v672, %v668
    %v973 = vpack.c.b16 %v677, %v673
    %v974 = vpack.c.b16 %v678, %v674
    %v975 = vpack.c.b16 %v679, %v675
    %v976 = vpack.c.b16 %v680, %v676
    %v977 = vpack.c.b16 %v685, %v681
    %v978 = vpack.c.b16 %v686, %v682
    %v979 = vpack.c.b16 %v687, %v683
    %v980 = vpack.c.b16 %v688, %v684
    %v981 = vpack.c.b16 %v693, %v689
    %v982 = vpack.c.b16 %v694, %v690
    %v983 = vpack.c.b16 %v695, %v691
    %v984 = vpack.c.b16 %v696, %v692
    %v985 = vpack.c.b16 %v701, %v697
    %v986 = vpack.c.b16 %v702, %v698
    %v987 = vpack.c.b16 %v703, %v699
    %v988 = vpack.c.b16 %v704, %v700
    %v989 = vpack.c.b16 %v709, %v705
    %v990 = vpack.c.b16 %v710, %v706
    %v991 = vpack.c.b16 %v711, %v707
    %v992 = vpack.c.b16 %v712, %v708
    %v993 = vpack.c.b16 %v717, %v713
    %v994 = vpack.c.b16 %v718, %v714
    %v995 = vpack.c.b16 %v719, %v715
    %v996 = vpack.c.b16 %v720, %v716
    %v997 = vpack.c.b16 %v725, %v721
    %v998 = vpack.c.b16 %v726, %v722
    %v999 = vpack.c.b16 %v727, %v723
    %v1000 = vpack.c.b16 %v728, %v724
    %v1001 = vpack.c.b16 %v733, %v729
    %v1002 = vpack.c.b16 %v734, %v730
    %v1003 = vpack.c.b16 %v735, %v731
    %v1004 = vpack.c.b16 %v736, %v732
    %v1005 = vpack.c.b16 %v741, %v737
    %v1006 = vpack.c.b16 %v742, %v738
    %v1007 = vpack.c.b16 %v743, %v739
    %v1008 = vpack.c.b16 %v744, %v740
    %v1009 = vpack.c.b16 %v749, %v745
    %v1010 = vpack.c.b16 %v750, %v746
    %v1011 = vpack.c.b16 %v751, %v747
    %v1012 = vpack.c.b16 %v752, %v748
    %v1013 = vpack.c.b16 %v757, %v753
    %v1014 = vpack.c.b16 %v758, %v754
    %v1015 = vpack.c.b16 %v759, %v755
    %v1016 = vpack.c.b16 %v760, %v756
    %v1017 = vpack.c.b16 %v765, %v761
    %v1018 = vpack.c.b16 %v766, %v762
    %v1019 = vpack.c.b16 %v767, %v763
    %v1020 = vpack.c.b16 %v768, %v764
    %v1021 = vpack.c.b16 %v773, %v769
    %v1022 = vpack.c.b16 %v774, %v770
    %v1023 = vpack.c.b16 %v775, %v771
    %v1024 = vpack.c.b16 %v776, %v772
    %v1025 = vpack.c.b16 %v781, %v777
    %v1026 = vpack.c.b16 %v782, %v778
    %v1027 = vpack.c.b16 %v783, %v779
    %v1028 = vpack.c.b16 %v784, %v780
    %v1029 = vpack.c.b16 %v789, %v785
    %v1030 = vpack.c.b16 %v790, %v786
    %v1031 = vpack.c.b16 %v791, %v787
    %v1032 = vpack.c.b16 %v792, %v788
    %v1033 = vpack.c.b16 %v797, %v793
    %v1034 = vpack.c.b16 %v798, %v794
    %v1035 = vpack.c.b16 %v799, %v795
    %v1036 = vpack.c.b16 %v800, %v796
    %v1037 = vpack.c.b16 %v805, %v801
    %v1038 = vpack.c.b16 %v806, %v802
    %v1039 = vpack.c.b16 %v807, %v803
    %v1040 = vpack.c.b16 %v808, %v804
    %v1041 = vpack.c.b16 %v813, %v809
    %v1042 = vpack.c.b16 %v814, %v810
    %v1043 = vpack.c.b16 %v815, %v811
    %v1044 = vpack.c.b16 %v816, %v812
    %v1045 = vpack.c.b16 %v821, %v817
    %v1046 = vpack.c.b16 %v822, %v818
    %v1047 = vpack.c.b16 %v823, %v819
    %v1048 = vpack.c.b16 %v824, %v820
    %v1049 = vpack.c.b16 %v829, %v825
    %v1050 = vpack.c.b16 %v830, %v826
    %v1051 = vpack.c.b16 %v831, %v827
    %v1052 = vpack.c.b16 %v832, %v828
    %v1053 = vpack.c.b16 %v837, %v833
    %v1054 = vpack.c.b16 %v838, %v834
    %v1055 = vpack.c.b16 %v839, %v835
    %v1056 = vpack.c.b16 %v840, %v836
    %v1057 = vpack.c.b16 %v845, %v841
    %v1058 = vpack.c.b16 %v846, %v842
    %v1059 = vpack.c.b16 %v847, %v843
    %v1060 = vpack.c.b16 %v848, %v844
    %v1061 = vpack.c.b16 %v853, %v849
    %v1062 = vpack.c.b16 %v854, %v850
    %v1063 = vpack.c.b16 %v855, %v851
    %v1064 = vpack.c.b16 %v856, %v852
    %v1065 = vpack.c.b16 %v861, %v857
    %v1066 = vpack.c.b16 %v862, %v858
    %v1067 = vpack.c.b16 %v863, %v859
    %v1068 = vpack.c.b16 %v864, %v860
    %v1069 = vpack.c.b16 %v869, %v865
    %v1070 = vpack.c.b16 %v870, %v866
    %v1071 = vpack.c.b16 %v871, %v867
    %v1072 = vpack.c.b16 %v872, %v868
    %v1073 = vpack.c.b16 %v877, %v873
    %v1074 = vpack.c.b16 %v878, %v874
    %v1075 = vpack.c.b16 %v879, %v875
    %v1076 = vpack.c.b16 %v880, %v876
    %v1077 = vpack.c.b16 %v885, %v881
    %v1078 = vpack.c.b16 %v886, %v882
    %v1079 = vpack.c.b16 %v887, %v883
    %v1080 = vpack.c.b16 %v888, %v884
    %1273 = vmatpush.bf16.msra.mxu0 %v917
    %1274 = vmatpush.bf16.msra.mxu0 %v913
    %1275 = vmatpush.bf16.msra.mxu0 %v909
    %1276 = vmatpush.bf16.msra.mxu0 %v905
    %1277 = vmatpush.bf16.msra.mxu0 %v901
    %1278 = vmatpush.bf16.msra.mxu0 %v897
    %1279 = vmatpush.bf16.msra.mxu0 %v893
    %1280 = vmatpush.bf16.msra.mxu0 %v889
    %1281 = vmatmul.bf16.gmra.mxu0 %v301
    %v1282 = vpop.f32.mrf.mxu0
    %v1283 = vadd.f32 %v284, %v1282
    %v1284 = vpop.f32.mrf.mxu0
    %1285 = vdwg.mxu0
    %1286 = vmatpush.bf16.msra.mxu0 %v949
    %1287 = vmatpush.bf16.msra.mxu0 %v945
    %1288 = vmatpush.bf16.msra.mxu0 %v941
    %1289 = vmatpush.bf16.msra.mxu0 %v937
    %1290 = vmatpush.bf16.msra.mxu0 %v933
    %1291 = vmatpush.bf16.msra.mxu0 %v929
    %1292 = vmatpush.bf16.msra.mxu0 %v925
    %1293 = vmatpush.bf16.msra.mxu0 %v921
    %1294 = vmatmul.bf16.gmra.mxu0 %v302
    %v1295 = vpop.f32.mrf.mxu0
    %v1296 = vadd.f32 %v1283, %v1295
    %v1297 = vpop.f32.mrf.mxu0
    %1298 = vdwg.mxu0
    %1299 = vmatpush.bf16.msra.mxu0 %v981
    %1300 = vmatpush.bf16.msra.mxu0 %v977
    %1301 = vmatpush.bf16.msra.mxu0 %v973
    %1302 = vmatpush.bf16.msra.mxu0 %v969
    %1303 = vmatpush.bf16.msra.mxu0 %v965
    %1304 = vmatpush.bf16.msra.mxu0 %v961
    %1305 = vmatpush.bf16.msra.mxu0 %v957
    %1306 = vmatpush.bf16.msra.mxu0 %v953
    %1307 = vmatmul.bf16.gmra.mxu0 %v303
    %v1308 = vpop.f32.mrf.mxu0
    %v1309 = vadd.f32 %v1296, %v1308
    %v1310 = vpop.f32.mrf.mxu0
    %1311 = vdwg.mxu0
    %1312 = vmatpush.bf16.msra.mxu0 %v1013
    %1313 = vmatpush.bf16.msra.mxu0 %v1009
    %1314 = vmatpush.bf16.msra.mxu0 %v1005
    %1315 = vmatpush.bf16.msra.mxu0 %v1001
    %1316 = vmatpush.bf16.msra.mxu0 %v997
    %1317 = vmatpush.bf16.msra.mxu0 %v993
    %1318 = vmatpush.bf16.msra.mxu0 %v989
    %1319 = vmatpush.bf16.msra.mxu0 %v985
    %1320 = vmatmul.bf16.gmra.mxu0 %v304
    %v1321 = vpop.f32.mrf.mxu0
    %v1322 = vadd.f32 %v1309, %v1321
    %v1323 = vpop.f32.mrf.mxu0
    %1324 = vdwg.mxu0
    %1325 = vmatpush.bf16.msra.mxu0 %v1045
    %1326 = vmatpush.bf16.msra.mxu0 %v1041
    %1327 = vmatpush.bf16.msra.mxu0 %v1037
    %1328 = vmatpush.bf16.msra.mxu0 %v1033
    %1329 = vmatpush.bf16.msra.mxu0 %v1029
    %1330 = vmatpush.bf16.msra.mxu0 %v1025
    %1331 = vmatpush.bf16.msra.mxu0 %v1021
    %1332 = vmatpush.bf16.msra.mxu0 %v1017
    %1333 = vmatmul.bf16.gmra.mxu0 %v305
    %v1334 = vpop.f32.mrf.mxu0
    %v1335 = vadd.f32 %v1322, %v1334
    %v1336 = vpop.f32.mrf.mxu0
    %1337 = vdwg.mxu0
    %1338 = vmatpush.bf16.msra.mxu0 %v1077
    %1339 = vmatpush.bf16.msra.mxu0 %v1073
    %1340 = vmatpush.bf16.msra.mxu0 %v1069
    %1341 = vmatpush.bf16.msra.mxu0 %v1065
    %1342 = vmatpush.bf16.msra.mxu0 %v1061
    %1343 = vmatpush.bf16.msra.mxu0 %v1057
    %1344 = vmatpush.bf16.msra.mxu0 %v1053
    %1345 = vmatpush.bf16.msra.mxu0 %v1049
    %1346 = vmatmul.bf16.gmra.mxu0 %v306
    %v1347 = vpop.f32.mrf.mxu0
    %v1348 = vadd.f32 %v1335, %v1347
    %v1349 = vpop.f32.mrf.mxu0
    %1350 = vdwg.mxu0
    %1351 = vmatpush.bf16.msra.mxu0 %v918
    %1352 = vmatpush.bf16.msra.mxu0 %v914
    %1353 = vmatpush.bf16.msra.mxu0 %v910
    %1354 = vmatpush.bf16.msra.mxu0 %v906
    %1355 = vmatpush.bf16.msra.mxu0 %v902
    %1356 = vmatpush.bf16.msra.mxu0 %v898
    %1357 = vmatpush.bf16.msra.mxu0 %v894
    %1358 = vmatpush.bf16.msra.mxu0 %v890
    %1359 = vmatmul.bf16.gmra.mxu0 %v301
    %v1360 = vpop.f32.mrf.mxu0
    %v1361 = vadd.f32 %v285, %v1360
    %v1362 = vpop.f32.mrf.mxu0
    %1363 = vdwg.mxu0
    %1364 = vmatpush.bf16.msra.mxu0 %v950
    %1365 = vmatpush.bf16.msra.mxu0 %v946
    %1366 = vmatpush.bf16.msra.mxu0 %v942
    %1367 = vmatpush.bf16.msra.mxu0 %v938
    %1368 = vmatpush.bf16.msra.mxu0 %v934
    %1369 = vmatpush.bf16.msra.mxu0 %v930
    %1370 = vmatpush.bf16.msra.mxu0 %v926
    %1371 = vmatpush.bf16.msra.mxu0 %v922
    %1372 = vmatmul.bf16.gmra.mxu0 %v302
    %v1373 = vpop.f32.mrf.mxu0
    %v1374 = vadd.f32 %v1361, %v1373
    %v1375 = vpop.f32.mrf.mxu0
    %1376 = vdwg.mxu0
    %1377 = vmatpush.bf16.msra.mxu0 %v982
    %1378 = vmatpush.bf16.msra.mxu0 %v978
    %1379 = vmatpush.bf16.msra.mxu0 %v974
    %1380 = vmatpush.bf16.msra.mxu0 %v970
    %1381 = vmatpush.bf16.msra.mxu0 %v966
    %1382 = vmatpush.bf16.msra.mxu0 %v962
    %1383 = vmatpush.bf16.msra.mxu0 %v958
    %1384 = vmatpush.bf16.msra.mxu0 %v954
    %1385 = vmatmul.bf16.gmra.mxu0 %v303
    %v1386 = vpop.f32.mrf.mxu0
    %v1387 = vadd.f32 %v1374, %v1386
    %v1388 = vpop.f32.mrf.mxu0
    %1389 = vdwg.mxu0
    %1390 = vmatpush.bf16.msra.mxu0 %v1014
    %1391 = vmatpush.bf16.msra.mxu0 %v1010
    %1392 = vmatpush.bf16.msra.mxu0 %v1006
    %1393 = vmatpush.bf16.msra.mxu0 %v1002
    %1394 = vmatpush.bf16.msra.mxu0 %v998
    %1395 = vmatpush.bf16.msra.mxu0 %v994
    %1396 = vmatpush.bf16.msra.mxu0 %v990
    %1397 = vmatpush.bf16.msra.mxu0 %v986
    %1398 = vmatmul.bf16.gmra.mxu0 %v304
    %v1399 = vpop.f32.mrf.mxu0
    %v1400 = vadd.f32 %v1387, %v1399
    %v1401 = vpop.f32.mrf.mxu0
    %1402 = vdwg.mxu0
    %1403 = vmatpush.bf16.msra.mxu0 %v1046
    %1404 = vmatpush.bf16.msra.mxu0 %v1042
    %1405 = vmatpush.bf16.msra.mxu0 %v1038
    %1406 = vmatpush.bf16.msra.mxu0 %v1034
    %1407 = vmatpush.bf16.msra.mxu0 %v1030
    %1408 = vmatpush.bf16.msra.mxu0 %v1026
    %1409 = vmatpush.bf16.msra.mxu0 %v1022
    %1410 = vmatpush.bf16.msra.mxu0 %v1018
    %1411 = vmatmul.bf16.gmra.mxu0 %v305
    %v1412 = vpop.f32.mrf.mxu0
    %v1413 = vadd.f32 %v1400, %v1412
    %v1414 = vpop.f32.mrf.mxu0
    %1415 = vdwg.mxu0
    %1416 = vmatpush.bf16.msra.mxu0 %v1078
    %1417 = vmatpush.bf16.msra.mxu0 %v1074
    %1418 = vmatpush.bf16.msra.mxu0 %v1070
    %1419 = vmatpush.bf16.msra.mxu0 %v1066
    %1420 = vmatpush.bf16.msra.mxu0 %v1062
    %1421 = vmatpush.bf16.msra.mxu0 %v1058
    %1422 = vmatpush.bf16.msra.mxu0 %v1054
    %1423 = vmatpush.bf16.msra.mxu0 %v1050
    %1424 = vmatmul.bf16.gmra.mxu0 %v306
    %v1425 = vpop.f32.mrf.mxu0
    %v1426 = vadd.f32 %v1413, %v1425
    %v1427 = vpop.f32.mrf.mxu0
    %1428 = vdwg.mxu0
    %1429 = vmatpush.bf16.msra.mxu0 %v919
    %1430 = vmatpush.bf16.msra.mxu0 %v915
    %1431 = vmatpush.bf16.msra.mxu0 %v911
    %1432 = vmatpush.bf16.msra.mxu0 %v907
    %1433 = vmatpush.bf16.msra.mxu0 %v903
    %1434 = vmatpush.bf16.msra.mxu0 %v899
    %1435 = vmatpush.bf16.msra.mxu0 %v895
    %1436 = vmatpush.bf16.msra.mxu0 %v891
    %1437 = vmatmul.bf16.gmra.mxu0 %v301
    %v1438 = vpop.f32.mrf.mxu0
    %v1439 = vadd.f32 %v286, %v1438
    %v1440 = vpop.f32.mrf.mxu0
    %1441 = vdwg.mxu0
    %1442 = vmatpush.bf16.msra.mxu0 %v951
    %1443 = vmatpush.bf16.msra.mxu0 %v947
    %1444 = vmatpush.bf16.msra.mxu0 %v943
    %1445 = vmatpush.bf16.msra.mxu0 %v939
    %1446 = vmatpush.bf16.msra.mxu0 %v935
    %1447 = vmatpush.bf16.msra.mxu0 %v931
    %1448 = vmatpush.bf16.msra.mxu0 %v927
    %1449 = vmatpush.bf16.msra.mxu0 %v923
    %1450 = vmatmul.bf16.gmra.mxu0 %v302
    %v1451 = vpop.f32.mrf.mxu0
    %v1452 = vadd.f32 %v1439, %v1451
    %v1453 = vpop.f32.mrf.mxu0
    %1454 = vdwg.mxu0
    %1455 = vmatpush.bf16.msra.mxu0 %v983
    %1456 = vmatpush.bf16.msra.mxu0 %v979
    %1457 = vmatpush.bf16.msra.mxu0 %v975
    %1458 = vmatpush.bf16.msra.mxu0 %v971
    %1459 = vmatpush.bf16.msra.mxu0 %v967
    %1460 = vmatpush.bf16.msra.mxu0 %v963
    %1461 = vmatpush.bf16.msra.mxu0 %v959
    %1462 = vmatpush.bf16.msra.mxu0 %v955
    %1463 = vmatmul.bf16.gmra.mxu0 %v303
    %v1464 = vpop.f32.mrf.mxu0
    %v1465 = vadd.f32 %v1452, %v1464
    %v1466 = vpop.f32.mrf.mxu0
    %1467 = vdwg.mxu0
    %1468 = vmatpush.bf16.msra.mxu0 %v1015
    %1469 = vmatpush.bf16.msra.mxu0 %v1011
    %1470 = vmatpush.bf16.msra.mxu0 %v1007
    %1471 = vmatpush.bf16.msra.mxu0 %v1003
    %1472 = vmatpush.bf16.msra.mxu0 %v999
    %1473 = vmatpush.bf16.msra.mxu0 %v995
    %1474 = vmatpush.bf16.msra.mxu0 %v991
    %1475 = vmatpush.bf16.msra.mxu0 %v987
    %1476 = vmatmul.bf16.gmra.mxu0 %v304
    %v1477 = vpop.f32.mrf.mxu0
    %v1478 = vadd.f32 %v1465, %v1477
    %v1479 = vpop.f32.mrf.mxu0
    %1480 = vdwg.mxu0
    %1481 = vmatpush.bf16.msra.mxu0 %v1047
    %1482 = vmatpush.bf16.msra.mxu0 %v1043
    %1483 = vmatpush.bf16.msra.mxu0 %v1039
    %1484 = vmatpush.bf16.msra.mxu0 %v1035
    %1485 = vmatpush.bf16.msra.mxu0 %v1031
    %1486 = vmatpush.bf16.msra.mxu0 %v1027
    %1487 = vmatpush.bf16.msra.mxu0 %v1023
    %1488 = vmatpush.bf16.msra.mxu0 %v1019
    %1489 = vmatmul.bf16.gmra.mxu0 %v305
    %v1490 = vpop.f32.mrf.mxu0
    %v1491 = vadd.f32 %v1478, %v1490
    %v1492 = vpop.f32.mrf.mxu0
    %1493 = vdwg.mxu0
    %1494 = vmatpush.bf16.msra.mxu0 %v1079
    %1495 = vmatpush.bf16.msra.mxu0 %v1075
    %1496 = vmatpush.bf16.msra.mxu0 %v1071
    %1497 = vmatpush.bf16.msra.mxu0 %v1067
    %1498 = vmatpush.bf16.msra.mxu0 %v1063
    %1499 = vmatpush.bf16.msra.mxu0 %v1059
    %1500 = vmatpush.bf16.msra.mxu0 %v1055
    %1501 = vmatpush.bf16.msra.mxu0 %v1051
    %1502 = vmatmul.bf16.gmra.mxu0 %v306
    %v1503 = vpop.f32.mrf.mxu0
    %v1504 = vadd.f32 %v1491, %v1503
    %v1505 = vpop.f32.mrf.mxu0
    %1506 = vdwg.mxu0
    %1507 = vmatpush.bf16.msra.mxu0 %v920
    %1508 = vmatpush.bf16.msra.mxu0 %v916
    %1509 = vmatpush.bf16.msra.mxu0 %v912
    %1510 = vmatpush.bf16.msra.mxu0 %v908
    %1511 = vmatpush.bf16.msra.mxu0 %v904
    %1512 = vmatpush.bf16.msra.mxu0 %v900
    %1513 = vmatpush.bf16.msra.mxu0 %v896
    %1514 = vmatpush.bf16.msra.mxu0 %v892
    %1515 = vmatmul.bf16.gmra.mxu0 %v301
    %v1516 = vpop.f32.mrf.mxu0
    %v1517 = vadd.f32 %v287, %v1516
    %v1518 = vpop.f32.mrf.mxu0
    %1519 = vdwg.mxu0
    %1520 = vmatpush.bf16.msra.mxu0 %v952
    %1521 = vmatpush.bf16.msra.mxu0 %v948
    %1522 = vmatpush.bf16.msra.mxu0 %v944
    %1523 = vmatpush.bf16.msra.mxu0 %v940
    %1524 = vmatpush.bf16.msra.mxu0 %v936
    %1525 = vmatpush.bf16.msra.mxu0 %v932
    %1526 = vmatpush.bf16.msra.mxu0 %v928
    %1527 = vmatpush.bf16.msra.mxu0 %v924
    %1528 = vmatmul.bf16.gmra.mxu0 %v302
    %v1529 = vpop.f32.mrf.mxu0
    %v1530 = vadd.f32 %v1517, %v1529
    %v1531 = vpop.f32.mrf.mxu0
    %1532 = vdwg.mxu0
    %1533 = vmatpush.bf16.msra.mxu0 %v984
    %1534 = vmatpush.bf16.msra.mxu0 %v980
    %1535 = vmatpush.bf16.msra.mxu0 %v976
    %1536 = vmatpush.bf16.msra.mxu0 %v972
    %1537 = vmatpush.bf16.msra.mxu0 %v968
    %1538 = vmatpush.bf16.msra.mxu0 %v964
    %1539 = vmatpush.bf16.msra.mxu0 %v960
    %1540 = vmatpush.bf16.msra.mxu0 %v956
    %1541 = vmatmul.bf16.gmra.mxu0 %v303
    %v1542 = vpop.f32.mrf.mxu0
    %v1543 = vadd.f32 %v1530, %v1542
    %v1544 = vpop.f32.mrf.mxu0
    %1545 = vdwg.mxu0
    %1546 = vmatpush.bf16.msra.mxu0 %v1016
    %1547 = vmatpush.bf16.msra.mxu0 %v1012
    %1548 = vmatpush.bf16.msra.mxu0 %v1008
    %1549 = vmatpush.bf16.msra.mxu0 %v1004
    %1550 = vmatpush.bf16.msra.mxu0 %v1000
    %1551 = vmatpush.bf16.msra.mxu0 %v996
    %1552 = vmatpush.bf16.msra.mxu0 %v992
    %1553 = vmatpush.bf16.msra.mxu0 %v988
    %1554 = vmatmul.bf16.gmra.mxu0 %v304
    %v1555 = vpop.f32.mrf.mxu0
    %v1556 = vadd.f32 %v1543, %v1555
    %v1557 = vpop.f32.mrf.mxu0
    %1558 = vdwg.mxu0
    %1559 = vmatpush.bf16.msra.mxu0 %v1048
    %1560 = vmatpush.bf16.msra.mxu0 %v1044
    %1561 = vmatpush.bf16.msra.mxu0 %v1040
    %1562 = vmatpush.bf16.msra.mxu0 %v1036
    %1563 = vmatpush.bf16.msra.mxu0 %v1032
    %1564 = vmatpush.bf16.msra.mxu0 %v1028
    %1565 = vmatpush.bf16.msra.mxu0 %v1024
    %1566 = vmatpush.bf16.msra.mxu0 %v1020
    %1567 = vmatmul.bf16.gmra.mxu0 %v305
    %v1568 = vpop.f32.mrf.mxu0
    %v1569 = vadd.f32 %v1556, %v1568
    %v1570 = vpop.f32.mrf.mxu0
    %1571 = vdwg.mxu0
    %1572 = vmatpush.bf16.msra.mxu0 %v1080
    %1573 = vmatpush.bf16.msra.mxu0 %v1076
    %1574 = vmatpush.bf16.msra.mxu0 %v1072
    %1575 = vmatpush.bf16.msra.mxu0 %v1068
    %1576 = vmatpush.bf16.msra.mxu0 %v1064
    %1577 = vmatpush.bf16.msra.mxu0 %v1060
    %1578 = vmatpush.bf16.msra.mxu0 %v1056
    %1579 = vmatpush.bf16.msra.mxu0 %v1052
    %1580 = vmatmul.bf16.gmra.mxu0 %v306
    %v1581 = vpop.f32.mrf.mxu0
    %v1582 = vadd.f32 %v1569, %v1581
    %v1583 = vpop.f32.mrf.mxu0
    %1584 = vdwg.mxu0
    %v1585 = vxor.u32 %v1348, 2147483648
    %v1586 = vxor.u32 %v1426, 2147483648
    %v1587 = vxor.u32 %v1504, 2147483648
    %v1588 = vxor.u32 %v1582, 2147483648
    %v1589 = vmul.f32 %v1585, 1.442695
    %v1590 = vpow.pop %v1589
    %v1591 = vmul.f32 %v1586, 1.442695
    %v1592 = vpow.pop %v1591
    %v1593 = vmul.f32 %v1587, 1.442695
    %v1594 = vpow.pop %v1593
    %v1595 = vmul.f32 %v1588, 1.442695
    %v1596 = vpow.pop %v1595
    %v1597 = vadd.f32 %v1590, 1.0
    %v1598 = vadd.f32 %v1592, 1.0
    %v1599 = vadd.f32 %v1594, 1.0
    %v1600 = vadd.f32 %v1596, 1.0
    %v1601 = vrcp.pop %v1597
    %v1602 = vmul.f32 %v1597, %v1601
    %v1603 = vsub.f32 1.0, %v1602
    %v1604 = vmul.f32 %v1601, %v1603
    %v1605 = vadd.f32 %v1601, %v1604
    %vm1606 = vweird.f32 %v1597
    %vm1607 = vweird.f32 %v1601
    %vm1608 = vmor %vm1606, %vm1607
    %v1609 = vsel %vm1608, %v1601, %v1605
    %v1610 = vand.u32 2147483647, %v1597
    %vm1611 = vcmp.eq.f32.partialorder %v1610, 8.507059e+37
    %v1612 = vand.u32 %v1597, 2147483648
    %v1613 = vor.u32 1.1754944e-38, %v1612
    %v1614 = vsel %vm1611, %v1613, %v1609
    %v1615 = vmul.f32 1.0, %v1614
    %v1616 = vrcp.pop %v1598
    %v1617 = vmul.f32 %v1598, %v1616
    %v1618 = vsub.f32 1.0, %v1617
    %v1619 = vmul.f32 %v1616, %v1618
    %v1620 = vadd.f32 %v1616, %v1619
    %vm1621 = vweird.f32 %v1598
    %vm1622 = vweird.f32 %v1616
    %vm1623 = vmor %vm1621, %vm1622
    %v1624 = vsel %vm1623, %v1616, %v1620
    %v1625 = vand.u32 2147483647, %v1598
    %vm1626 = vcmp.eq.f32.partialorder %v1625, 8.507059e+37
    %v1627 = vand.u32 %v1598, 2147483648
    %v1628 = vor.u32 1.1754944e-38, %v1627
    %v1629 = vsel %vm1626, %v1628, %v1624
    %v1630 = vmul.f32 1.0, %v1629
    %v1631 = vrcp.pop %v1599
    %v1632 = vmul.f32 %v1599, %v1631
    %v1633 = vsub.f32 1.0, %v1632
    %v1634 = vmul.f32 %v1631, %v1633
    %v1635 = vadd.f32 %v1631, %v1634
    %vm1636 = vweird.f32 %v1599
    %vm1637 = vweird.f32 %v1631
    %vm1638 = vmor %vm1636, %vm1637
    %v1639 = vsel %vm1638, %v1631, %v1635
    %v1640 = vand.u32 2147483647, %v1599
    %vm1641 = vcmp.eq.f32.partialorder %v1640, 8.507059e+37
    %v1642 = vand.u32 %v1599, 2147483648
    %v1643 = vor.u32 1.1754944e-38, %v1642
    %v1644 = vsel %vm1641, %v1643, %v1639
    %v1645 = vmul.f32 1.0, %v1644
    %v1646 = vrcp.pop %v1600
    %v1647 = vmul.f32 %v1600, %v1646
    %v1648 = vsub.f32 1.0, %v1647
    %v1649 = vmul.f32 %v1646, %v1648
    %v1650 = vadd.f32 %v1646, %v1649
    %vm1651 = vweird.f32 %v1600
    %vm1652 = vweird.f32 %v1646
    %vm1653 = vmor %vm1651, %vm1652
    %v1654 = vsel %vm1653, %v1646, %v1650
    %v1655 = vand.u32 2147483647, %v1600
    %vm1656 = vcmp.eq.f32.partialorder %v1655, 8.507059e+37
    %v1657 = vand.u32 %v1600, 2147483648
    %v1658 = vor.u32 1.1754944e-38, %v1657
    %v1659 = vsel %vm1656, %v1658, %v1654
    %v1660 = vmul.f32 1.0, %v1659
    %v1661 = vmul.f32 %v1348, %v1615
    %v1662 = vmul.f32 %v1426, %v1630
    %v1663 = vmul.f32 %v1504, %v1645
    %v1664 = vmul.f32 %v1582, %v1660
    %v1665 = vpack.c.bf16 %v1661, %v1661
    %v1666 = vpack.c.bf16 %v1662, %v1662
    %v1667 = vpack.c.bf16 %v1663, %v1663
    %v1668 = vpack.c.bf16 %v1664, %v1664
    %v1669 = vld [vmem:[#allocation8] sm:$0xff]
    %v1670 = vld [vmem:[#allocation8 + $0x8] sm:$0xff]
    %v1671 = vld [vmem:[#allocation8 + $0x10] sm:$0xff]
    %v1672 = vld [vmem:[#allocation8 + $0x18] sm:$0xff]
    %v1673 = vld [vmem:[#allocation8 + $0x20] sm:$0xff]
    %v1674 = vld [vmem:[#allocation8 + $0x28] sm:$0xff]
    %v1675 = vld [vmem:[#allocation8 + $0x30] sm:$0xff]
    %v1676 = vld [vmem:[#allocation8 + $0x38] sm:$0xff]
    %v1677 = vld [vmem:[#allocation8 + $0x40] sm:$0xff]
    %v1678 = vld [vmem:[#allocation8 + $0x48] sm:$0xff]
    %v1679 = vld [vmem:[#allocation8 + $0x50] sm:$0xff]
    %v1680 = vld [vmem:[#allocation8 + $0x58] sm:$0xff]
    %v1681 = vld [vmem:[#allocation8 + $0x60] sm:$0xff]
    %v1682 = vld [vmem:[#allocation8 + $0x68] sm:$0xff]
    %v1683 = vld [vmem:[#allocation8 + $0x70] sm:$0xff]
    %v1684 = vld [vmem:[#allocation8 + $0x78] sm:$0xff]
    %v1685 = vld [vmem:[#allocation8 + $0x80] sm:$0xff]
    %v1686 = vld [vmem:[#allocation8 + $0x88] sm:$0xff]
    %v1687 = vld [vmem:[#allocation8 + $0x90] sm:$0xff]
    %v1688 = vld [vmem:[#allocation8 + $0x98] sm:$0xff]
    %v1689 = vld [vmem:[#allocation8 + $0xa0] sm:$0xff]
    %v1690 = vld [vmem:[#allocation8 + $0xa8] sm:$0xff]
    %v1691 = vld [vmem:[#allocation8 + $0xb0] sm:$0xff]
    %v1692 = vld [vmem:[#allocation8 + $0xb8] sm:$0xff]
    %v1693 = vld [vmem:[#allocation8 + $0xc0] sm:$0xff]
    %v1694 = vld [vmem:[#allocation8 + $0xc8] sm:$0xff]
    %v1695 = vld [vmem:[#allocation8 + $0xd0] sm:$0xff]
    %v1696 = vld [vmem:[#allocation8 + $0xd8] sm:$0xff]
    %v1697 = vld [vmem:[#allocation8 + $0xe0] sm:$0xff]
    %v1698 = vld [vmem:[#allocation8 + $0xe8] sm:$0xff]
    %v1699 = vld [vmem:[#allocation8 + $0xf0] sm:$0xff]
    %v1700 = vld [vmem:[#allocation8 + $0xf8] sm:$0xff]
    %v1701 = vld [vmem:[#allocation8 + $0x100] sm:$0xff]
    %v1702 = vld [vmem:[#allocation8 + $0x108] sm:$0xff]
    %v1703 = vld [vmem:[#allocation8 + $0x110] sm:$0xff]
    %v1704 = vld [vmem:[#allocation8 + $0x118] sm:$0xff]
    %v1705 = vld [vmem:[#allocation8 + $0x120] sm:$0xff]
    %v1706 = vld [vmem:[#allocation8 + $0x128] sm:$0xff]
    %v1707 = vld [vmem:[#allocation8 + $0x130] sm:$0xff]
    %v1708 = vld [vmem:[#allocation8 + $0x138] sm:$0xff]
    %v1709 = vld [vmem:[#allocation8 + $0x140] sm:$0xff]
    %v1710 = vld [vmem:[#allocation8 + $0x148] sm:$0xff]
    %v1711 = vld [vmem:[#allocation8 + $0x150] sm:$0xff]
    %v1712 = vld [vmem:[#allocation8 + $0x158] sm:$0xff]
    %v1713 = vld [vmem:[#allocation8 + $0x160] sm:$0xff]
    %v1714 = vld [vmem:[#allocation8 + $0x168] sm:$0xff]
    %v1715 = vld [vmem:[#allocation8 + $0x170] sm:$0xff]
    %v1716 = vld [vmem:[#allocation8 + $0x178] sm:$0xff]
    %v1717 = vld [vmem:[#allocation8 + $0x180] sm:$0xff]
    %v1718 = vld [vmem:[#allocation8 + $0x188] sm:$0xff]
    %v1719 = vld [vmem:[#allocation8 + $0x190] sm:$0xff]
    %v1720 = vld [vmem:[#allocation8 + $0x198] sm:$0xff]
    %v1721 = vld [vmem:[#allocation8 + $0x1a0] sm:$0xff]
    %v1722 = vld [vmem:[#allocation8 + $0x1a8] sm:$0xff]
    %v1723 = vld [vmem:[#allocation8 + $0x1b0] sm:$0xff]
    %v1724 = vld [vmem:[#allocation8 + $0x1b8] sm:$0xff]
    %v1725 = vld [vmem:[#allocation8 + $0x1c0] sm:$0xff]
    %v1726 = vld [vmem:[#allocation8 + $0x1c8] sm:$0xff]
    %v1727 = vld [vmem:[#allocation8 + $0x1d0] sm:$0xff]
    %v1728 = vld [vmem:[#allocation8 + $0x1d8] sm:$0xff]
    %v1729 = vld [vmem:[#allocation8 + $0x1e0] sm:$0xff]
    %v1730 = vld [vmem:[#allocation8 + $0x1e8] sm:$0xff]
    %v1731 = vld [vmem:[#allocation8 + $0x1f0] sm:$0xff]
    %v1732 = vld [vmem:[#allocation8 + $0x1f8] sm:$0xff]
    %v1733 = vld [vmem:[%s4] sm:$0x3]
    %v1735 = vperm.slane %v1733, 0
    %v1736 = vperm.slane %v1733, 1
    %v1803 = vunpack.c.l.b16 %v1669
    %v1804 = vunpack.c.h.b16 %v1669
    %v1805 = vunpack.c.l.b16 %v1670
    %v1806 = vunpack.c.h.b16 %v1670
    %v1807 = vunpack.c.l.b16 %v1671
    %v1808 = vunpack.c.h.b16 %v1671
    %v1809 = vunpack.c.l.b16 %v1672
    %v1810 = vunpack.c.h.b16 %v1672
    %v1811 = vunpack.c.l.b16 %v1673
    %v1812 = vunpack.c.h.b16 %v1673
    %v1813 = vunpack.c.l.b16 %v1674
    %v1814 = vunpack.c.h.b16 %v1674
    %v1815 = vunpack.c.l.b16 %v1675
    %v1816 = vunpack.c.h.b16 %v1675
    %v1817 = vunpack.c.l.b16 %v1676
    %v1818 = vunpack.c.h.b16 %v1676
    %v1819 = vunpack.c.l.b16 %v1677
    %v1820 = vunpack.c.h.b16 %v1677
    %v1821 = vunpack.c.l.b16 %v1678
    %v1822 = vunpack.c.h.b16 %v1678
    %v1823 = vunpack.c.l.b16 %v1679
    %v1824 = vunpack.c.h.b16 %v1679
    %v1825 = vunpack.c.l.b16 %v1680
    %v1826 = vunpack.c.h.b16 %v1680
    %v1827 = vunpack.c.l.b16 %v1681
    %v1828 = vunpack.c.h.b16 %v1681
    %v1829 = vunpack.c.l.b16 %v1682
    %v1830 = vunpack.c.h.b16 %v1682
    %v1831 = vunpack.c.l.b16 %v1683
    %v1832 = vunpack.c.h.b16 %v1683
    %v1833 = vunpack.c.l.b16 %v1684
    %v1834 = vunpack.c.h.b16 %v1684
    %v1835 = vunpack.c.l.b16 %v1685
    %v1836 = vunpack.c.h.b16 %v1685
    %v1837 = vunpack.c.l.b16 %v1686
    %v1838 = vunpack.c.h.b16 %v1686
    %v1839 = vunpack.c.l.b16 %v1687
    %v1840 = vunpack.c.h.b16 %v1687
    %v1841 = vunpack.c.l.b16 %v1688
    %v1842 = vunpack.c.h.b16 %v1688
    %v1843 = vunpack.c.l.b16 %v1689
    %v1844 = vunpack.c.h.b16 %v1689
    %v1845 = vunpack.c.l.b16 %v1690
    %v1846 = vunpack.c.h.b16 %v1690
    %v1847 = vunpack.c.l.b16 %v1691
    %v1848 = vunpack.c.h.b16 %v1691
    %v1849 = vunpack.c.l.b16 %v1692
    %v1850 = vunpack.c.h.b16 %v1692
    %v1851 = vunpack.c.l.b16 %v1693
    %v1852 = vunpack.c.h.b16 %v1693
    %v1853 = vunpack.c.l.b16 %v1694
    %v1854 = vunpack.c.h.b16 %v1694
    %v1855 = vunpack.c.l.b16 %v1695
    %v1856 = vunpack.c.h.b16 %v1695
    %v1857 = vunpack.c.l.b16 %v1696
    %v1858 = vunpack.c.h.b16 %v1696
    %v1859 = vunpack.c.l.b16 %v1697
    %v1860 = vunpack.c.h.b16 %v1697
    %v1861 = vunpack.c.l.b16 %v1698
    %v1862 = vunpack.c.h.b16 %v1698
    %v1863 = vunpack.c.l.b16 %v1699
    %v1864 = vunpack.c.h.b16 %v1699
    %v1865 = vunpack.c.l.b16 %v1700
    %v1866 = vunpack.c.h.b16 %v1700
    %v1867 = vunpack.c.l.b16 %v1701
    %v1868 = vunpack.c.h.b16 %v1701
    %v1869 = vunpack.c.l.b16 %v1702
    %v1870 = vunpack.c.h.b16 %v1702
    %v1871 = vunpack.c.l.b16 %v1703
    %v1872 = vunpack.c.h.b16 %v1703
    %v1873 = vunpack.c.l.b16 %v1704
    %v1874 = vunpack.c.h.b16 %v1704
    %v1875 = vunpack.c.l.b16 %v1705
    %v1876 = vunpack.c.h.b16 %v1705
    %v1877 = vunpack.c.l.b16 %v1706
    %v1878 = vunpack.c.h.b16 %v1706
    %v1879 = vunpack.c.l.b16 %v1707
    %v1880 = vunpack.c.h.b16 %v1707
    %v1881 = vunpack.c.l.b16 %v1708
    %v1882 = vunpack.c.h.b16 %v1708
    %v1883 = vunpack.c.l.b16 %v1709
    %v1884 = vunpack.c.h.b16 %v1709
    %v1885 = vunpack.c.l.b16 %v1710
    %v1886 = vunpack.c.h.b16 %v1710
    %v1887 = vunpack.c.l.b16 %v1711
    %v1888 = vunpack.c.h.b16 %v1711
    %v1889 = vunpack.c.l.b16 %v1712
    %v1890 = vunpack.c.h.b16 %v1712
    %v1891 = vunpack.c.l.b16 %v1713
    %v1892 = vunpack.c.h.b16 %v1713
    %v1893 = vunpack.c.l.b16 %v1714
    %v1894 = vunpack.c.h.b16 %v1714
    %v1895 = vunpack.c.l.b16 %v1715
    %v1896 = vunpack.c.h.b16 %v1715
    %v1897 = vunpack.c.l.b16 %v1716
    %v1898 = vunpack.c.h.b16 %v1716
    %v1899 = vunpack.c.l.b16 %v1717
    %v1900 = vunpack.c.h.b16 %v1717
    %v1901 = vunpack.c.l.b16 %v1718
    %v1902 = vunpack.c.h.b16 %v1718
    %v1903 = vunpack.c.l.b16 %v1719
    %v1904 = vunpack.c.h.b16 %v1719
    %v1905 = vunpack.c.l.b16 %v1720
    %v1906 = vunpack.c.h.b16 %v1720
    %v1907 = vunpack.c.l.b16 %v1721
    %v1908 = vunpack.c.h.b16 %v1721
    %v1909 = vunpack.c.l.b16 %v1722
    %v1910 = vunpack.c.h.b16 %v1722
    %v1911 = vunpack.c.l.b16 %v1723
    %v1912 = vunpack.c.h.b16 %v1723
    %v1913 = vunpack.c.l.b16 %v1724
    %v1914 = vunpack.c.h.b16 %v1724
    %v1915 = vunpack.c.l.b16 %v1725
    %v1916 = vunpack.c.h.b16 %v1725
    %v1917 = vunpack.c.l.b16 %v1726
    %v1918 = vunpack.c.h.b16 %v1726
    %v1919 = vunpack.c.l.b16 %v1727
    %v1920 = vunpack.c.h.b16 %v1727
    %v1921 = vunpack.c.l.b16 %v1728
    %v1922 = vunpack.c.h.b16 %v1728
    %v1923 = vunpack.c.l.b16 %v1729
    %v1924 = vunpack.c.h.b16 %v1729
    %v1925 = vunpack.c.l.b16 %v1730
    %v1926 = vunpack.c.h.b16 %v1730
    %v1927 = vunpack.c.l.b16 %v1731
    %v1928 = vunpack.c.h.b16 %v1731
    %v1929 = vunpack.c.l.b16 %v1732
    %v1930 = vunpack.c.h.b16 %v1732
    %v1931 = vpack.c.b16 %v1805, %v1803
    %v1932 = vpack.c.b16 %v1806, %v1804
    %v1933 = vpack.c.b16 %v1809, %v1807
    %v1934 = vpack.c.b16 %v1810, %v1808
    %v1935 = vpack.c.b16 %v1813, %v1811
    %v1936 = vpack.c.b16 %v1814, %v1812
    %v1937 = vpack.c.b16 %v1817, %v1815
    %v1938 = vpack.c.b16 %v1818, %v1816
    %v1939 = vpack.c.b16 %v1821, %v1819
    %v1940 = vpack.c.b16 %v1822, %v1820
    %v1941 = vpack.c.b16 %v1825, %v1823
    %v1942 = vpack.c.b16 %v1826, %v1824
    %v1943 = vpack.c.b16 %v1829, %v1827
    %v1944 = vpack.c.b16 %v1830, %v1828
    %v1945 = vpack.c.b16 %v1833, %v1831
    %v1946 = vpack.c.b16 %v1834, %v1832
    %v1947 = vpack.c.b16 %v1837, %v1835
    %v1948 = vpack.c.b16 %v1838, %v1836
    %v1949 = vpack.c.b16 %v1841, %v1839
    %v1950 = vpack.c.b16 %v1842, %v1840
    %v1951 = vpack.c.b16 %v1845, %v1843
    %v1952 = vpack.c.b16 %v1846, %v1844
    %v1953 = vpack.c.b16 %v1849, %v1847
    %v1954 = vpack.c.b16 %v1850, %v1848
    %v1955 = vpack.c.b16 %v1853, %v1851
    %v1956 = vpack.c.b16 %v1854, %v1852
    %v1957 = vpack.c.b16 %v1857, %v1855
    %v1958 = vpack.c.b16 %v1858, %v1856
    %v1959 = vpack.c.b16 %v1861, %v1859
    %v1960 = vpack.c.b16 %v1862, %v1860
    %v1961 = vpack.c.b16 %v1865, %v1863
    %v1962 = vpack.c.b16 %v1866, %v1864
    %v1963 = vpack.c.b16 %v1869, %v1867
    %v1964 = vpack.c.b16 %v1870, %v1868
    %v1965 = vpack.c.b16 %v1873, %v1871
    %v1966 = vpack.c.b16 %v1874, %v1872
    %v1967 = vpack.c.b16 %v1877, %v1875
    %v1968 = vpack.c.b16 %v1878, %v1876
    %v1969 = vpack.c.b16 %v1881, %v1879
    %v1970 = vpack.c.b16 %v1882, %v1880
    %v1971 = vpack.c.b16 %v1885, %v1883
    %v1972 = vpack.c.b16 %v1886, %v1884
    %v1973 = vpack.c.b16 %v1889, %v1887
    %v1974 = vpack.c.b16 %v1890, %v1888
    %v1975 = vpack.c.b16 %v1893, %v1891
    %v1976 = vpack.c.b16 %v1894, %v1892
    %v1977 = vpack.c.b16 %v1897, %v1895
    %v1978 = vpack.c.b16 %v1898, %v1896
    %v1979 = vpack.c.b16 %v1901, %v1899
    %v1980 = vpack.c.b16 %v1902, %v1900
    %v1981 = vpack.c.b16 %v1905, %v1903
    %v1982 = vpack.c.b16 %v1906, %v1904
    %v1983 = vpack.c.b16 %v1909, %v1907
    %v1984 = vpack.c.b16 %v1910, %v1908
    %v1985 = vpack.c.b16 %v1913, %v1911
    %v1986 = vpack.c.b16 %v1914, %v1912
    %v1987 = vpack.c.b16 %v1917, %v1915
    %v1988 = vpack.c.b16 %v1918, %v1916
    %v1989 = vpack.c.b16 %v1921, %v1919
    %v1990 = vpack.c.b16 %v1922, %v1920
    %v1991 = vpack.c.b16 %v1925, %v1923
    %v1992 = vpack.c.b16 %v1926, %v1924
    %v1993 = vpack.c.b16 %v1929, %v1927
    %v1994 = vpack.c.b16 %v1930, %v1928
    %2059 = vmatpush.bf16.msra.mxu0 %v1945
    %2060 = vmatpush.bf16.msra.mxu0 %v1943
    %2061 = vmatpush.bf16.msra.mxu0 %v1941
    %2062 = vmatpush.bf16.msra.mxu0 %v1939
    %2063 = vmatpush.bf16.msra.mxu0 %v1937
    %2064 = vmatpush.bf16.msra.mxu0 %v1935
    %2065 = vmatpush.bf16.msra.mxu0 %v1933
    %2066 = vmatpush.bf16.msra.mxu0 %v1931
    %2067 = vmatmul.bf16.gmra.mxu0 %v1665
    %v2068 = vpop.f32.mrf.mxu0
    %v2069 = vadd.f32 %v1735, %v2068
    %v2070 = vpop.f32.mrf.mxu0
    %2071 = vdwg.mxu0
    %2072 = vmatpush.bf16.msra.mxu0 %v1961
    %2073 = vmatpush.bf16.msra.mxu0 %v1959
    %2074 = vmatpush.bf16.msra.mxu0 %v1957
    %2075 = vmatpush.bf16.msra.mxu0 %v1955
    %2076 = vmatpush.bf16.msra.mxu0 %v1953
    %2077 = vmatpush.bf16.msra.mxu0 %v1951
    %2078 = vmatpush.bf16.msra.mxu0 %v1949
    %2079 = vmatpush.bf16.msra.mxu0 %v1947
    %2080 = vmatmul.bf16.gmra.mxu0 %v1666
    %v2081 = vpop.f32.mrf.mxu0
    %v2082 = vadd.f32 %v2069, %v2081
    %v2083 = vpop.f32.mrf.mxu0
    %2084 = vdwg.mxu0
    %2085 = vmatpush.bf16.msra.mxu0 %v1977
    %2086 = vmatpush.bf16.msra.mxu0 %v1975
    %2087 = vmatpush.bf16.msra.mxu0 %v1973
    %2088 = vmatpush.bf16.msra.mxu0 %v1971
    %2089 = vmatpush.bf16.msra.mxu0 %v1969
    %2090 = vmatpush.bf16.msra.mxu0 %v1967
    %2091 = vmatpush.bf16.msra.mxu0 %v1965
    %2092 = vmatpush.bf16.msra.mxu0 %v1963
    %2093 = vmatmul.bf16.gmra.mxu0 %v1667
    %v2094 = vpop.f32.mrf.mxu0
    %v2095 = vadd.f32 %v2082, %v2094
    %v2096 = vpop.f32.mrf.mxu0
    %2097 = vdwg.mxu0
    %2098 = vmatpush.bf16.msra.mxu0 %v1993
    %2099 = vmatpush.bf16.msra.mxu0 %v1991
    %2100 = vmatpush.bf16.msra.mxu0 %v1989
    %2101 = vmatpush.bf16.msra.mxu0 %v1987
    %2102 = vmatpush.bf16.msra.mxu0 %v1985
    %2103 = vmatpush.bf16.msra.mxu0 %v1983
    %2104 = vmatpush.bf16.msra.mxu0 %v1981
    %2105 = vmatpush.bf16.msra.mxu0 %v1979
    %2106 = vmatmul.bf16.gmra.mxu0 %v1668
    %v2107 = vpop.f32.mrf.mxu0
    %v2108 = vadd.f32 %v2095, %v2107
    %v2109 = vpop.f32.mrf.mxu0
    %2110 = vdwg.mxu0
    %2111 = vmatpush.bf16.msra.mxu0 %v1946
    %2112 = vmatpush.bf16.msra.mxu0 %v1944
    %2113 = vmatpush.bf16.msra.mxu0 %v1942
    %2114 = vmatpush.bf16.msra.mxu0 %v1940
    %2115 = vmatpush.bf16.msra.mxu0 %v1938
    %2116 = vmatpush.bf16.msra.mxu0 %v1936
    %2117 = vmatpush.bf16.msra.mxu0 %v1934
    %2118 = vmatpush.bf16.msra.mxu0 %v1932
    %2119 = vmatmul.bf16.gmra.mxu0 %v1665
    %v2120 = vpop.f32.mrf.mxu0
    %v2121 = vadd.f32 %v1736, %v2120
    %v2122 = vpop.f32.mrf.mxu0
    %2123 = vdwg.mxu0
    %2124 = vmatpush.bf16.msra.mxu0 %v1962
    %2125 = vmatpush.bf16.msra.mxu0 %v1960
    %2126 = vmatpush.bf16.msra.mxu0 %v1958
    %2127 = vmatpush.bf16.msra.mxu0 %v1956
    %2128 = vmatpush.bf16.msra.mxu0 %v1954
    %2129 = vmatpush.bf16.msra.mxu0 %v1952
    %2130 = vmatpush.bf16.msra.mxu0 %v1950
    %2131 = vmatpush.bf16.msra.mxu0 %v1948
    %2132 = vmatmul.bf16.gmra.mxu0 %v1666
    %v2133 = vpop.f32.mrf.mxu0
    %v2134 = vadd.f32 %v2121, %v2133
    %v2135 = vpop.f32.mrf.mxu0
    %2136 = vdwg.mxu0
    %2137 = vmatpush.bf16.msra.mxu0 %v1978
    %2138 = vmatpush.bf16.msra.mxu0 %v1976
    %2139 = vmatpush.bf16.msra.mxu0 %v1974
    %2140 = vmatpush.bf16.msra.mxu0 %v1972
    %2141 = vmatpush.bf16.msra.mxu0 %v1970
    %2142 = vmatpush.bf16.msra.mxu0 %v1968
    %2143 = vmatpush.bf16.msra.mxu0 %v1966
    %2144 = vmatpush.bf16.msra.mxu0 %v1964
    %2145 = vmatmul.bf16.gmra.mxu0 %v1667
    %v2146 = vpop.f32.mrf.mxu0
    %v2147 = vadd.f32 %v2134, %v2146
    %v2148 = vpop.f32.mrf.mxu0
    %2149 = vdwg.mxu0
    %2150 = vmatpush.bf16.msra.mxu0 %v1994
    %2151 = vmatpush.bf16.msra.mxu0 %v1992
    %2152 = vmatpush.bf16.msra.mxu0 %v1990
    %2153 = vmatpush.bf16.msra.mxu0 %v1988
    %2154 = vmatpush.bf16.msra.mxu0 %v1986
    %2155 = vmatpush.bf16.msra.mxu0 %v1984
    %2156 = vmatpush.bf16.msra.mxu0 %v1982
    %2157 = vmatpush.bf16.msra.mxu0 %v1980
    %2158 = vmatmul.bf16.gmra.mxu0 %v1668
    %v2159 = vpop.f32.mrf.mxu0
    %v2160 = vadd.f32 %v2147, %v2159
    %v2161 = vpop.f32.mrf.mxu0
    %2162 = vdwg.mxu0
    %v2163 = vxor.u32 %v2108, 2147483648
    %v2164 = vxor.u32 %v2160, 2147483648
    %v2165 = vmul.f32 %v2163, 1.442695
    %v2166 = vpow.pop %v2165
    %v2167 = vmul.f32 %v2164, 1.442695
    %v2168 = vpow.pop %v2167
    %v2169 = vadd.f32 %v2166, 1.0
    %v2170 = vadd.f32 %v2168, 1.0
    %v2171 = vrcp.pop %v2169
    %v2172 = vmul.f32 %v2169, %v2171
    %v2173 = vsub.f32 1.0, %v2172
    %v2174 = vmul.f32 %v2171, %v2173
    %v2175 = vadd.f32 %v2171, %v2174
    %vm2176 = vweird.f32 %v2169
    %vm2177 = vweird.f32 %v2171
    %vm2178 = vmor %vm2176, %vm2177
    %v2179 = vsel %vm2178, %v2171, %v2175
    %v2180 = vand.u32 2147483647, %v2169
    %vm2181 = vcmp.eq.f32.partialorder %v2180, 8.507059e+37
    %v2182 = vand.u32 %v2169, 2147483648
    %v2183 = vor.u32 1.1754944e-38, %v2182
    %v2184 = vsel %vm2181, %v2183, %v2179
    %v2185 = vmul.f32 1.0, %v2184
    %v2186 = vrcp.pop %v2170
    %v2187 = vmul.f32 %v2170, %v2186
    %v2188 = vsub.f32 1.0, %v2187
    %v2189 = vmul.f32 %v2186, %v2188
    %v2190 = vadd.f32 %v2186, %v2189
    %vm2191 = vweird.f32 %v2170
    %vm2192 = vweird.f32 %v2186
    %vm2193 = vmor %vm2191, %vm2192
    %v2194 = vsel %vm2193, %v2186, %v2190
    %v2195 = vand.u32 2147483647, %v2170
    %vm2196 = vcmp.eq.f32.partialorder %v2195, 8.507059e+37
    %v2197 = vand.u32 %v2170, 2147483648
    %v2198 = vor.u32 1.1754944e-38, %v2197
    %v2199 = vsel %vm2196, %v2198, %v2194
    %v2200 = vmul.f32 1.0, %v2199
    %v2201 = vmul.f32 %v2108, %v2185
    %v2202 = vmul.f32 %v2160, %v2200
    %v2203 = vld [vmem:[%s5] sm:$0x3]
    %v2205 = vperm.slane %v2203, 0
    %v2206 = vperm.slane %v2203, 1
    %v2209 = vmul.f32 %v2201, %v2205
    %v2210 = vmul.f32 %v2202, %v2206
    %v2211 = vadd.f32 %v2209, %v2210
    %2212 = vadd.xlane.f32.xlu0 %v2211
    %v2213 = vpop.xlane.xlu0 %2212
    %v2214 = vld [vmem:[#allocation2] sm:$0x1]
    %v2216 = vperm.slane %v2214, 0
    %v2218 = vadd.f32 %v2213, %v2216
    %vm2219 = vcmask 7168
    %2220 = vst.msk [vmem:[%s7] sm:$0xff] %vm2219, %v2218
    // Predicated region
    $region46: #{tpu_custom_call.1} parent=1 // pred_check
      _
    $region47: #{tpu_custom_call.1} parent=1 // pred_check_branch
      %2222 = sbr.rel (0) target = $region49
    $region48: #{tpu_custom_call.1} parent=1 // pred_region
      _
    $region49: #{tpu_custom_call.1} parent=1 // pred_fallthru
      _
    // Predicated region
    $region50: #{tpu_custom_call.1} parent=1 // pred_check
      _
    $region51: #{tpu_custom_call.1} parent=1 // pred_check_branch
      %2224 = sbr.rel (0) target = $region53
    $region52: #{tpu_custom_call.1} parent=1 // pred_region
      _
    $region53: #{tpu_custom_call.1} parent=1 // pred_fallthru
      _
    %2225 = vsyncpa [#allocation4], 1
    %2226 = vsyncpa [#allocation6], 1
    %2227 = vsyncpa [#allocation9], 1

</llo_original>
